<compile_context>
chip_gen: v7x
topology: tpu7x:2x2x1
jax: 0.10.0
libtpu: 0.0.40
codegen_flags: <defaults>
</compile_context>

<pallas_src>
import functools

import jax
import jax.numpy as jnp
from jax.experimental import pallas as pl
from jax.experimental.pallas import tpu as pltpu

BN_EPS = 1e-5


# ---------------------------------------------------------------------------
# Kernel
# ---------------------------------------------------------------------------
def _bn_relu_packed(acc, pp, gamma_p, beta_p, count):
    """Training-mode BatchNorm + ReLU on the packed (rows, W*C) layout.

    acc:     (rows, W*C) f32 conv output, lane index = w*C + c
    pp:      (W*C, W*C)  0/1 matrix, pp[l, l'] = (l % C == l' % C)
    gamma_p: (1, W*C)    gamma broadcast to the packed lane layout
    beta_p:  (1, W*C)    beta  broadcast to the packed lane layout
    count:   python int  number of elements per channel (N*H*W)
    """
    row_sum = jnp.sum(acc, axis=0, keepdims=True)          # (1, W*C)
    row_sq = jnp.sum(acc * acc, axis=0, keepdims=True)     # (1, W*C)
    # Per-channel pooling AND broadcast-back in one matmul each.
    s = jnp.dot(row_sum, pp, preferred_element_type=jnp.float32)   # (1, W*C)
    ss = jnp.dot(row_sq, pp, preferred_element_type=jnp.float32)   # (1, W*C)
    mean = s / count
    var = ss / count - mean * mean
    scale = gamma_p * jax.lax.rsqrt(var + BN_EPS)           # (1, W*C)
    shift = beta_p - mean * scale                           # (1, W*C)
    return jnp.maximum(acc * scale + shift, 0.0)


def _bridge_kernel(x_ref, t1_ref, t2_ref, pp1_ref, pp2_ref,
                   g1_ref, be1_ref, g2_ref, be2_ref,
                   o_ref, xp1_ref, xp2_ref,
                   *, n, h, w, c_mid, c_out):
    """Fused Bridge forward.

    x_ref:   (N, H, W*Cin)           packed input
    t1_ref:  (3, W*Cin,  W*Cmid)     block-1 Toeplitz conv weights (per ky)
    t2_ref:  (3, W*Cmid, W*Cout)     block-2 Toeplitz conv weights (per ky)
    pp*_ref: (W*C, W*C)              same-channel pooling matrices
    g*/be*:  (1, W*C)                packed BN gamma / beta
    o_ref:   (N*H, W*Cout)           packed output (lane-dense)
    xp1_ref: (N, H+2, W*Cin)  VMEM   H-padded block-1 input
    xp2_ref: (N, H+2, W*Cmid) VMEM   H-padded block-1 output (intermediate)
    """
    rows = n * h
    l_in = x_ref.shape[-1]          # W * Cin
    l_mid = w * c_mid
    l_out = w * c_out

    # ---------------- ConvBlock 1 ----------------
    # pad=1 along H: zeroed halo rows in VMEM scratch (no wrapper jnp.pad,
    # no extra HBM pass).  pad=1 along W is folded into the Toeplitz weights.
    xp1_ref[...] = jnp.zeros_like(xp1_ref)
    xp1_ref[:, 1:h + 1, :] = x_ref[...]

    acc = jnp.zeros((rows, l_mid), jnp.float32)
    for ky in range(3):
        lhs = xp1_ref[:, ky:ky + h, :].reshape(rows, l_in)
        acc += jnp.dot(lhs, t1_ref[ky], preferred_element_type=jnp.float32)
    # Conv bias omitted: training-mode BN subtracts the per-channel batch
    # mean, which cancels a constant shift exactly.
    y = _bn_relu_packed(acc, pp1_ref[...], g1_ref[...], be1_ref[...], rows * w)

    # ---------------- ConvBlock 2 (intermediate stays in VMEM) -------------
    xp2_ref[...] = jnp.zeros_like(xp2_ref)
    xp2_ref[:, 1:h + 1, :] = y.reshape(n, h, l_mid)

    acc = jnp.zeros((rows, l_out), jnp.float32)
    for ky in range(3):
        lhs = xp2_ref[:, ky:ky + h, :].reshape(rows, l_mid)
        acc += jnp.dot(lhs, t2_ref[ky], preferred_element_type=jnp.float32)
    o_ref[...] = _bn_relu_packed(acc, pp2_ref[...], g2_ref[...], be2_ref[...],
                                 rows * w)


# ---------------------------------------------------------------------------
# Wrapper-side weight preparation (plain JAX, tiny, constant-folded under jit)
# ---------------------------------------------------------------------------
def _toeplitz_from_hwio(w_hwio, width):
    """HWIO 3x3 weights -> (3, width*Cin, width*Cout) banded block-Toeplitz.

    T[ky][wp*Cin + ci, wo*Cout + co] = w[ky, wp-wo+1, ci, co] when the tap is
    in range, else 0 -- i.e. the W-direction 'same' padding is baked in.
    """
    kh, kw, cin, cout = w_hwio.shape
    wp = jnp.arange(width)[:, None]              # input column
    wo = jnp.arange(width)[None, :]              # output column
    kx = wp - wo + (kw // 2)                     # tap index
    valid = (kx >= 0) & (kx < kw)
    taps = w_hwio[:, jnp.clip(kx, 0, kw - 1)]    # (kh, width, width, cin, cout)
    taps = jnp.where(valid[None, :, :, None, None], taps, 0.0)
    taps = jnp.transpose(taps, (0, 1, 3, 2, 4))  # (kh, wp, cin, wo, cout)
    return taps.reshape(kh, width * cin, width * cout)


def _same_channel_matrix(width, c):
    """(W*C, W*C) 0/1 matrix: pp[l, l'] = (l % C == l' % C)."""
    lane = jnp.arange(width * c)
    return (lane[:, None] % c == lane[None, :] % c).astype(jnp.float32)


def _pack_per_channel(v, width):
    """(C,) -> (1, W*C) matching lane index w*C + c."""
    return jnp.tile(v, width).reshape(1, width * v.shape[0])


# ---------------------------------------------------------------------------
# Public forward (NCHW in / NCHW out, like the PyTorch module)
# ---------------------------------------------------------------------------
@jax.jit
def bridge_forward(x_nchw, params):
    (w1, _b1, g1, be1), (w2, _b2, g2, be2) = params  # conv biases cancelled by BN
    N, Cin, H, W = x_nchw.shape
    Cmid = w1.shape[-1]
    Cout = w2.shape[-1]

    # NCHW -> NHWC -> packed (N, H, W*Cin); channels on the fast lane axis.
    x = jnp.transpose(x_nchw, (0, 2, 3, 1)).reshape(N, H, W * Cin)

    t1 = _toeplitz_from_hwio(w1, W)                 # (3, W*Cin,  W*Cmid)
    t2 = _toeplitz_from_hwio(w2, W)                 # (3, W*Cmid, W*Cout)
    pp1 = _same_channel_matrix(W, Cmid)             # (W*Cmid, W*Cmid)
    pp2 = _same_channel_matrix(W, Cout)             # (W*Cout, W*Cout)
    g1p, be1p = _pack_per_channel(g1, W), _pack_per_channel(be1, W)
    g2p, be2p = _pack_per_channel(g2, W), _pack_per_channel(be2, W)

    kernel = functools.partial(_bridge_kernel, n=N, h=H, w=W,
                               c_mid=Cmid, c_out=Cout)
    vmem = pl.BlockSpec(memory_space=pltpu.MemorySpace.VMEM)
    out2d = pl.pallas_call(
        kernel,
        out_shape=jax.ShapeDtypeStruct((N * H, W * Cout), jnp.float32),
        in_specs=[vmem] * 9,
        out_specs=vmem,
        scratch_shapes=[
            pltpu.VMEM((N, H + 2, W * Cin), jnp.float32),   # padded input
            pltpu.VMEM((N, H + 2, W * Cmid), jnp.float32),  # padded intermediate
        ],
    )(x, t1, t2, pp1, pp2, g1p, be1p, g2p, be2p)

    out = out2d.reshape(N, H, W, Cout)
    return jnp.transpose(out, (0, 3, 1, 2))         # NHWC -> NCHW


# ---------------------------------------------------------------------------
# Parameters + pure-JAX reference (mirrors PyTorch Conv2d + BN(train) + ReLU)
# ---------------------------------------------------------------------------
def init_bridge_params(key, in_channels, out_channels):
    k1, k2, k3, k4 = jax.random.split(key, 4)
    w1 = jax.random.normal(k1, (3, 3, in_channels, out_channels),
                           jnp.float32) * 0.1
    b1 = jax.random.normal(k2, (out_channels,), jnp.float32) * 0.01
    g1 = jnp.ones((out_channels,), jnp.float32)
    be1 = jnp.zeros((out_channels,), jnp.float32)
    w2 = jax.random.normal(k3, (3, 3, out_channels, out_channels),
                           jnp.float32) * 0.1
    b2 = jax.random.normal(k4, (out_channels,), jnp.float32) * 0.01
    g2 = jnp.ones((out_channels,), jnp.float32)
    be2 = jnp.zeros((out_channels,), jnp.float32)
    return ((w1, b1, g1, be1), (w2, b2, g2, be2))


def _reference_bridge(x_nchw, params):
    x = jnp.transpose(x_nchw, (0, 2, 3, 1))
    for (w, b, g, be) in params:
        y = jax.lax.conv_general_dilated(
            x, w, window_strides=(1, 1), padding=((1, 1), (1, 1)),
            dimension_numbers=("NHWC", "HWIO", "NHWC")) + b
        mean = jnp.mean(y, axis=(0, 1, 2), keepdims=True)
        var = jnp.mean((y - mean) ** 2, axis=(0, 1, 2), keepdims=True)
        y = (y - mean) * jax.lax.rsqrt(var + BN_EPS) * g + be
        x = jnp.maximum(y, 0.0)
    return jnp.transpose(x, (0, 3, 1, 2))


if __name__ == "__main__":
    key = jax.random.PRNGKey(0)
    kx, kp = jax.random.split(key)

    in_channels, out_channels = 4, 8
    N, H, W = 2, 16, 16
    x = jax.random.normal(kx, (N, in_channels, H, W), jnp.float32)  # NCHW

    params = init_bridge_params(kp, in_channels, out_channels)

    out = bridge_forward(x, params)
    out = jax.block_until_ready(out)
    assert out.shape == (N, out_channels, H, W)

    ref = jax.block_until_ready(_reference_bridge(x, params))
    assert jnp.allclose(out, ref, atol=1e-3, rtol=1e-3), (
        float(jnp.max(jnp.abs(out - ref))))

    print("KERNEL_OK")
</pallas_src>

<mosaic_0001>
module attributes {stable_mosaic.version = 11 : i64} {
  func.func @_bridge_kernel(%arg0: memref<2x16x64xf32, #tpu.memory_space<vmem>>, %arg1: memref<3x64x128xf32, #tpu.memory_space<vmem>>, %arg2: memref<3x128x128xf32, #tpu.memory_space<vmem>>, %arg3: memref<128x128xf32, #tpu.memory_space<vmem>>, %arg4: memref<128x128xf32, #tpu.memory_space<vmem>>, %arg5: memref<1x128xf32, #tpu.memory_space<vmem>>, %arg6: memref<1x128xf32, #tpu.memory_space<vmem>>, %arg7: memref<1x128xf32, #tpu.memory_space<vmem>>, %arg8: memref<1x128xf32, #tpu.memory_space<vmem>>, %arg9: memref<32x128xf32, #tpu.memory_space<vmem>>, %arg10: memref<2x18x64xf32, #tpu.memory_space<vmem>>, %arg11: memref<2x18x128xf32, #tpu.memory_space<vmem>>) attributes {dimension_semantics = [], scalar_prefetch = 0 : i64, scratch_operands = 2 : i64, tpu.core_type = #tpu.core_type<tc>} {
    %cst = arith.constant 0.000000e+00 : f32
    %0 = vector.broadcast %cst : f32 to vector<2x18x64xf32>
    %c0 = arith.constant 0 : index
    %c0_0 = arith.constant 0 : index
    %c0_1 = arith.constant 0 : index
    %1 = vector.load %arg10[%c0, %c0_0, %c0_1] : memref<2x18x64xf32, #tpu.memory_space<vmem>>, vector<2x18x64xf32>
    tpu.vector_store %arg10[%c0, %c0_0, %c0_1], %0 {strides = array<i32>} : memref<2x18x64xf32, #tpu.memory_space<vmem>>, vector<2x18x64xf32>,
    %c0_2 = arith.constant 0 : index
    %c0_3 = arith.constant 0 : index
    %c0_4 = arith.constant 0 : index
    %2 = vector.load %arg0[%c0_2, %c0_3, %c0_4] : memref<2x16x64xf32, #tpu.memory_space<vmem>>, vector<2x16x64xf32>
    %c0_5 = arith.constant 0 : index
    %c1 = arith.constant 1 : index
    %c0_6 = arith.constant 0 : index
    %3 = vector.load %arg10[%c0_5, %c1, %c0_6] : memref<2x18x64xf32, #tpu.memory_space<vmem>>, vector<2x16x64xf32>
    tpu.vector_store %arg10[%c0_5, %c1, %c0_6], %2 {strides = array<i32>} : memref<2x18x64xf32, #tpu.memory_space<vmem>>, vector<2x16x64xf32>,
    %cst_7 = arith.constant 0.000000e+00 : f32
    %4 = vector.broadcast %cst_7 : f32 to vector<32x128xf32>
    %c0_8 = arith.constant 0 : index
    %c0_9 = arith.constant 0 : index
    %c0_10 = arith.constant 0 : index
    %5 = vector.load %arg10[%c0_8, %c0_9, %c0_10] : memref<2x18x64xf32, #tpu.memory_space<vmem>>, vector<2x16x64xf32>
    %6 = vector.shape_cast %5 : vector<2x16x64xf32> to vector<32x64xf32>
    %c0_11 = arith.constant 0 : index
    %c0_12 = arith.constant 0 : index
    %c0_13 = arith.constant 0 : index
    %7 = vector.load %arg1[%c0_11, %c0_12, %c0_13] : memref<3x64x128xf32, #tpu.memory_space<vmem>>, vector<1x64x128xf32>
    %8 = vector.shape_cast %7 : vector<1x64x128xf32> to vector<64x128xf32>
    %cst_14 = arith.constant dense<0.000000e+00> : vector<32x128xf32>
    %9 = tpu.matmul %6, %8, %cst_14 {dimension_numbers = #tpu.dot_dimension_numbers<[1], [0], [0], [1], [0, 0, 1, 1], [], []>} : vector<32x64xf32>, vector<64x128xf32>, vector<32x128xf32> -> vector<32x128xf32>
    %10 = arith.addf %4, %9 : vector<32x128xf32>
    %c0_15 = arith.constant 0 : index
    %c1_16 = arith.constant 1 : index
    %c0_17 = arith.constant 0 : index
    %11 = vector.load %arg10[%c0_15, %c1_16, %c0_17] : memref<2x18x64xf32, #tpu.memory_space<vmem>>, vector<2x16x64xf32>
    %12 = vector.shape_cast %11 : vector<2x16x64xf32> to vector<32x64xf32>
    %c1_18 = arith.constant 1 : index
    %c0_19 = arith.constant 0 : index
    %c0_20 = arith.constant 0 : index
    %13 = vector.load %arg1[%c1_18, %c0_19, %c0_20] : memref<3x64x128xf32, #tpu.memory_space<vmem>>, vector<1x64x128xf32>
    %14 = vector.shape_cast %13 : vector<1x64x128xf32> to vector<64x128xf32>
    %cst_21 = arith.constant dense<0.000000e+00> : vector<32x128xf32>
    %15 = tpu.matmul %12, %14, %cst_21 {dimension_numbers = #tpu.dot_dimension_numbers<[1], [0], [0], [1], [0, 0, 1, 1], [], []>} : vector<32x64xf32>, vector<64x128xf32>, vector<32x128xf32> -> vector<32x128xf32>
    %16 = arith.addf %10, %15 : vector<32x128xf32>
    %c0_22 = arith.constant 0 : index
    %c2 = arith.constant 2 : index
    %c0_23 = arith.constant 0 : index
    %17 = vector.load %arg10[%c0_22, %c2, %c0_23] : memref<2x18x64xf32, #tpu.memory_space<vmem>>, vector<2x16x64xf32>
    %18 = vector.shape_cast %17 : vector<2x16x64xf32> to vector<32x64xf32>
    %c2_24 = arith.constant 2 : index
    %c0_25 = arith.constant 0 : index
    %c0_26 = arith.constant 0 : index
    %19 = vector.load %arg1[%c2_24, %c0_25, %c0_26] : memref<3x64x128xf32, #tpu.memory_space<vmem>>, vector<1x64x128xf32>
    %20 = vector.shape_cast %19 : vector<1x64x128xf32> to vector<64x128xf32>
    %cst_27 = arith.constant dense<0.000000e+00> : vector<32x128xf32>
    %21 = tpu.matmul %18, %20, %cst_27 {dimension_numbers = #tpu.dot_dimension_numbers<[1], [0], [0], [1], [0, 0, 1, 1], [], []>} : vector<32x64xf32>, vector<64x128xf32>, vector<32x128xf32> -> vector<32x128xf32>
    %22 = arith.addf %16, %21 : vector<32x128xf32>
    %c0_28 = arith.constant 0 : index
    %c0_29 = arith.constant 0 : index
    %23 = vector.load %arg3[%c0_28, %c0_29] : memref<128x128xf32, #tpu.memory_space<vmem>>, vector<128x128xf32>
    %c0_30 = arith.constant 0 : index
    %c0_31 = arith.constant 0 : index
    %24 = vector.load %arg5[%c0_30, %c0_31] : memref<1x128xf32, #tpu.memory_space<vmem>>, vector<1x128xf32>
    %c0_32 = arith.constant 0 : index
    %c0_33 = arith.constant 0 : index
    %25 = vector.load %arg6[%c0_32, %c0_33] : memref<1x128xf32, #tpu.memory_space<vmem>>, vector<1x128xf32>
    %cst_34 = arith.constant dense<0.000000e+00> : vector<128xf32>
    %26 = vector.multi_reduction <add>, %22, %cst_34 [0] : vector<32x128xf32> to vector<128xf32>
    %27 = vector.shape_cast %26 : vector<128xf32> to vector<1x128xf32>
    %28 = arith.mulf %22, %22 : vector<32x128xf32>
    %cst_35 = arith.constant dense<0.000000e+00> : vector<128xf32>
    %29 = vector.multi_reduction <add>, %28, %cst_35 [0] : vector<32x128xf32> to vector<128xf32>
    %30 = vector.shape_cast %29 : vector<128xf32> to vector<1x128xf32>
    %cst_36 = arith.constant dense<0.000000e+00> : vector<1x128xf32>
    %31 = tpu.matmul %27, %23, %cst_36 {dimension_numbers = #tpu.dot_dimension_numbers<[1], [0], [0], [1], [0, 0, 1, 1], [], []>} : vector<1x128xf32>, vector<128x128xf32>, vector<1x128xf32> -> vector<1x128xf32>
    %cst_37 = arith.constant dense<0.000000e+00> : vector<1x128xf32>
    %32 = tpu.matmul %30, %23, %cst_37 {dimension_numbers = #tpu.dot_dimension_numbers<[1], [0], [0], [1], [0, 0, 1, 1], [], []>} : vector<1x128xf32>, vector<128x128xf32>, vector<1x128xf32> -> vector<1x128xf32>
    %cst_38 = arith.constant 5.120000e+02 : f32
    %33 = vector.broadcast %cst_38 : f32 to vector<1x128xf32>
    %34 = arith.divf %31, %33 : vector<1x128xf32>
    %cst_39 = arith.constant 5.120000e+02 : f32
    %35 = vector.broadcast %cst_39 : f32 to vector<1x128xf32>
    %36 = arith.divf %32, %35 : vector<1x128xf32>
    %37 = arith.mulf %34, %34 : vector<1x128xf32>
    %38 = arith.subf %36, %37 : vector<1x128xf32>
    %cst_40 = arith.constant 9.99999974E-6 : f32
    %39 = vector.broadcast %cst_40 : f32 to vector<1x128xf32>
    %40 = arith.addf %38, %39 : vector<1x128xf32>
    %41 = math.rsqrt %40 : vector<1x128xf32>
    %42 = arith.mulf %24, %41 : vector<1x128xf32>
    %43 = arith.mulf %34, %42 : vector<1x128xf32>
    %44 = arith.subf %25, %43 : vector<1x128xf32>
    %45 = vector.broadcast %42 : vector<1x128xf32> to vector<32x128xf32>
    %46 = arith.mulf %22, %45 : vector<32x128xf32>
    %47 = vector.broadcast %44 : vector<1x128xf32> to vector<32x128xf32>
    %48 = arith.addf %46, %47 : vector<32x128xf32>
    %cst_41 = arith.constant 0.000000e+00 : f32
    %49 = vector.broadcast %cst_41 : f32 to vector<32x128xf32>
    %50 = arith.maximumf %48, %49 : vector<32x128xf32>
    %cst_42 = arith.constant 0.000000e+00 : f32
    %51 = vector.broadcast %cst_42 : f32 to vector<2x18x128xf32>
    %c0_43 = arith.constant 0 : index
    %c0_44 = arith.constant 0 : index
    %c0_45 = arith.constant 0 : index
    %52 = vector.load %arg11[%c0_43, %c0_44, %c0_45] : memref<2x18x128xf32, #tpu.memory_space<vmem>>, vector<2x18x128xf32>
    tpu.vector_store %arg11[%c0_43, %c0_44, %c0_45], %51 {strides = array<i32>} : memref<2x18x128xf32, #tpu.memory_space<vmem>>, vector<2x18x128xf32>,
    %53 = vector.shape_cast %50 : vector<32x128xf32> to vector<2x16x128xf32>
    %c0_46 = arith.constant 0 : index
    %c1_47 = arith.constant 1 : index
    %c0_48 = arith.constant 0 : index
    %54 = vector.load %arg11[%c0_46, %c1_47, %c0_48] : memref<2x18x128xf32, #tpu.memory_space<vmem>>, vector<2x16x128xf32>
    tpu.vector_store %arg11[%c0_46, %c1_47, %c0_48], %53 {strides = array<i32>} : memref<2x18x128xf32, #tpu.memory_space<vmem>>, vector<2x16x128xf32>,
    %cst_49 = arith.constant 0.000000e+00 : f32
    %55 = vector.broadcast %cst_49 : f32 to vector<32x128xf32>
    %c0_50 = arith.constant 0 : index
    %c0_51 = arith.constant 0 : index
    %c0_52 = arith.constant 0 : index
    %56 = vector.load %arg11[%c0_50, %c0_51, %c0_52] : memref<2x18x128xf32, #tpu.memory_space<vmem>>, vector<2x16x128xf32>
    %57 = vector.shape_cast %56 : vector<2x16x128xf32> to vector<32x128xf32>
    %c0_53 = arith.constant 0 : index
    %c0_54 = arith.constant 0 : index
    %c0_55 = arith.constant 0 : index
    %58 = vector.load %arg2[%c0_53, %c0_54, %c0_55] : memref<3x128x128xf32, #tpu.memory_space<vmem>>, vector<1x128x128xf32>
    %59 = vector.shape_cast %58 : vector<1x128x128xf32> to vector<128x128xf32>
    %cst_56 = arith.constant dense<0.000000e+00> : vector<32x128xf32>
    %60 = tpu.matmul %57, %59, %cst_56 {dimension_numbers = #tpu.dot_dimension_numbers<[1], [0], [0], [1], [0, 0, 1, 1], [], []>} : vector<32x128xf32>, vector<128x128xf32>, vector<32x128xf32> -> vector<32x128xf32>
    %61 = arith.addf %55, %60 : vector<32x128xf32>
    %c0_57 = arith.constant 0 : index
    %c1_58 = arith.constant 1 : index
    %c0_59 = arith.constant 0 : index
    %62 = vector.load %arg11[%c0_57, %c1_58, %c0_59] : memref<2x18x128xf32, #tpu.memory_space<vmem>>, vector<2x16x128xf32>
    %63 = vector.shape_cast %62 : vector<2x16x128xf32> to vector<32x128xf32>
    %c1_60 = arith.constant 1 : index
    %c0_61 = arith.constant 0 : index
    %c0_62 = arith.constant 0 : index
    %64 = vector.load %arg2[%c1_60, %c0_61, %c0_62] : memref<3x128x128xf32, #tpu.memory_space<vmem>>, vector<1x128x128xf32>
    %65 = vector.shape_cast %64 : vector<1x128x128xf32> to vector<128x128xf32>
    %cst_63 = arith.constant dense<0.000000e+00> : vector<32x128xf32>
    %66 = tpu.matmul %63, %65, %cst_63 {dimension_numbers = #tpu.dot_dimension_numbers<[1], [0], [0], [1], [0, 0, 1, 1], [], []>} : vector<32x128xf32>, vector<128x128xf32>, vector<32x128xf32> -> vector<32x128xf32>
    %67 = arith.addf %61, %66 : vector<32x128xf32>
    %c0_64 = arith.constant 0 : index
    %c2_65 = arith.constant 2 : index
    %c0_66 = arith.constant 0 : index
    %68 = vector.load %arg11[%c0_64, %c2_65, %c0_66] : memref<2x18x128xf32, #tpu.memory_space<vmem>>, vector<2x16x128xf32>
    %69 = vector.shape_cast %68 : vector<2x16x128xf32> to vector<32x128xf32>
    %c2_67 = arith.constant 2 : index
    %c0_68 = arith.constant 0 : index
    %c0_69 = arith.constant 0 : index
    %70 = vector.load %arg2[%c2_67, %c0_68, %c0_69] : memref<3x128x128xf32, #tpu.memory_space<vmem>>, vector<1x128x128xf32>
    %71 = vector.shape_cast %70 : vector<1x128x128xf32> to vector<128x128xf32>
    %cst_70 = arith.constant dense<0.000000e+00> : vector<32x128xf32>
    %72 = tpu.matmul %69, %71, %cst_70 {dimension_numbers = #tpu.dot_dimension_numbers<[1], [0], [0], [1], [0, 0, 1, 1], [], []>} : vector<32x128xf32>, vector<128x128xf32>, vector<32x128xf32> -> vector<32x128xf32>
    %73 = arith.addf %67, %72 : vector<32x128xf32>
    %c0_71 = arith.constant 0 : index
    %c0_72 = arith.constant 0 : index
    %74 = vector.load %arg4[%c0_71, %c0_72] : memref<128x128xf32, #tpu.memory_space<vmem>>, vector<128x128xf32>
    %c0_73 = arith.constant 0 : index
    %c0_74 = arith.constant 0 : index
    %75 = vector.load %arg7[%c0_73, %c0_74] : memref<1x128xf32, #tpu.memory_space<vmem>>, vector<1x128xf32>
    %c0_75 = arith.constant 0 : index
    %c0_76 = arith.constant 0 : index
    %76 = vector.load %arg8[%c0_75, %c0_76] : memref<1x128xf32, #tpu.memory_space<vmem>>, vector<1x128xf32>
    %cst_77 = arith.constant dense<0.000000e+00> : vector<128xf32>
    %77 = vector.multi_reduction <add>, %73, %cst_77 [0] : vector<32x128xf32> to vector<128xf32>
    %78 = vector.shape_cast %77 : vector<128xf32> to vector<1x128xf32>
    %79 = arith.mulf %73, %73 : vector<32x128xf32>
    %cst_78 = arith.constant dense<0.000000e+00> : vector<128xf32>
    %80 = vector.multi_reduction <add>, %79, %cst_78 [0] : vector<32x128xf32> to vector<128xf32>
    %81 = vector.shape_cast %80 : vector<128xf32> to vector<1x128xf32>
    %cst_79 = arith.constant dense<0.000000e+00> : vector<1x128xf32>
    %82 = tpu.matmul %78, %74, %cst_79 {dimension_numbers = #tpu.dot_dimension_numbers<[1], [0], [0], [1], [0, 0, 1, 1], [], []>} : vector<1x128xf32>, vector<128x128xf32>, vector<1x128xf32> -> vector<1x128xf32>
    %cst_80 = arith.constant dense<0.000000e+00> : vector<1x128xf32>
    %83 = tpu.matmul %81, %74, %cst_80 {dimension_numbers = #tpu.dot_dimension_numbers<[1], [0], [0], [1], [0, 0, 1, 1], [], []>} : vector<1x128xf32>, vector<128x128xf32>, vector<1x128xf32> -> vector<1x128xf32>
    %cst_81 = arith.constant 5.120000e+02 : f32
    %84 = vector.broadcast %cst_81 : f32 to vector<1x128xf32>
    %85 = arith.divf %82, %84 : vector<1x128xf32>
    %cst_82 = arith.constant 5.120000e+02 : f32
    %86 = vector.broadcast %cst_82 : f32 to vector<1x128xf32>
    %87 = arith.divf %83, %86 : vector<1x128xf32>
    %88 = arith.mulf %85, %85 : vector<1x128xf32>
    %89 = arith.subf %87, %88 : vector<1x128xf32>
    %cst_83 = arith.constant 9.99999974E-6 : f32
    %90 = vector.broadcast %cst_83 : f32 to vector<1x128xf32>
    %91 = arith.addf %89, %90 : vector<1x128xf32>
    %92 = math.rsqrt %91 : vector<1x128xf32>
    %93 = arith.mulf %75, %92 : vector<1x128xf32>
    %94 = arith.mulf %85, %93 : vector<1x128xf32>
    %95 = arith.subf %76, %94 : vector<1x128xf32>
    %96 = vector.broadcast %93 : vector<1x128xf32> to vector<32x128xf32>
    %97 = arith.mulf %73, %96 : vector<32x128xf32>
    %98 = vector.broadcast %95 : vector<1x128xf32> to vector<32x128xf32>
    %99 = arith.addf %97, %98 : vector<32x128xf32>
    %cst_84 = arith.constant 0.000000e+00 : f32
    %100 = vector.broadcast %cst_84 : f32 to vector<32x128xf32>
    %101 = arith.maximumf %99, %100 : vector<32x128xf32>
    %c0_85 = arith.constant 0 : index
    %c0_86 = arith.constant 0 : index
    %102 = vector.load %arg9[%c0_85, %c0_86] : memref<32x128xf32, #tpu.memory_space<vmem>>, vector<32x128xf32>
    tpu.vector_store %arg9[%c0_85, %c0_86], %101 {strides = array<i32>} : memref<32x128xf32, #tpu.memory_space<vmem>>, vector<32x128xf32>,
    return
  }
}

</mosaic_0001>

<llo_original>
// kernel: tile.23
$region0: #{tile.23}
  #allocation0 [shape = 's32[1]{0}', space=sflag, size = 0x4, scoped, tag = 'scoped memory for tile.23']
  %s0 = inlined_call_operand.vmem [shape: f32[8], index: 0, kind: input, shape index: {}]
  %s1 = inlined_call_operand.vmem [shape: f32[16,8], index: 1, kind: output, shape index: {}]
  // Predicated region
  $region2: #{tile.23} parent=0 // pred_check
    _
  $region3: #{tile.23} parent=0 // pred_check_branch
    %3 = sbr.rel (0) target = $region5
  $region4: #{tile.23} parent=0 // pred_region
    _
  $region5: #{tile.23} parent=0 // pred_fallthru
    _
  %v4 = vld [vmem:[%s0] ss:$0 sm:$0xff]
  %5 = vst [vmem:[%s1] sm:$0xff] %v4
  %s6 = scalar_lea.vmem %s1, 8
  %7 = vst [vmem:[%s6] sm:$0xff] %v4

// kernel: tile.24
$region0: #{tile.24}
  %s0 = inlined_call_operand.vmem [shape: f32[16,8], index: 0, kind: input, shape index: {}]
  %s1 = inlined_call_operand.vmem [shape: f32[1,128], index: 1, kind: output, shape index: {}]
  $region1: #{tile.24} parent=0
    #allocation0 [shape = 'u8[4096]{0}', space=vmem, size = 0x1000, scoped, tag = 'scoped mem for output reshape']
    %v2 = vld [vmem:[%s0] sm:$0x1]
    %vm3 = vcmask 64512
    %4 = vst.msk [vmem:[#allocation0] sm:$0x1] %vm3, %v2
    %s5 = scalar_lea.vmem %s0, 15
    %v6 = vld [vmem:[%s5] sm:$0x1]
    %7 = vrot.lane.b32.xlu0 %v6, 120
    %v8 = vpop.permute.xlu0 %7
    %vm9 = vcmask 1048512
    %10 = vst.msk [vmem:[#allocation0] sm:$0x1] %vm9, %v8
    %s11 = scalar_lea.vmem %s0, 14
    %v12 = vld [vmem:[%s11] sm:$0x1]
    %13 = vrot.lane.b32.xlu0 %v12, 112
    %v14 = vpop.permute.xlu0 %13
    %vm15 = vcmask 982912
    %16 = vst.msk [vmem:[#allocation0] sm:$0x1] %vm15, %v14
    %s17 = scalar_lea.vmem %s0, 13
    %v18 = vld [vmem:[%s17] sm:$0x1]
    %19 = vrot.lane.b32.xlu0 %v18, 104
    %v20 = vpop.permute.xlu0 %19
    %vm21 = vcmask 917312
    %22 = vst.msk [vmem:[#allocation0] sm:$0x1] %vm21, %v20
    %s23 = scalar_lea.vmem %s0, 12
    %v24 = vld [vmem:[%s23] sm:$0x1]
    %25 = vrot.lane.b32.xlu0 %v24, 96
    %v26 = vpop.permute.xlu0 %25
    %vm27 = vcmask 851712
    %28 = vst.msk [vmem:[#allocation0] sm:$0x1] %vm27, %v26
    %s29 = scalar_lea.vmem %s0, 11
    %v30 = vld [vmem:[%s29] sm:$0x1]
    %31 = vrot.lane.b32.xlu0 %v30, 88
    %v32 = vpop.permute.xlu0 %31
    %vm33 = vcmask 786112
    %34 = vst.msk [vmem:[#allocation0] sm:$0x1] %vm33, %v32
    %s35 = scalar_lea.vmem %s0, 10
    %v36 = vld [vmem:[%s35] sm:$0x1]
    %37 = vrot.lane.b32.xlu0 %v36, 80
    %v38 = vpop.permute.xlu0 %37
    %vm39 = vcmask 720512
    %40 = vst.msk [vmem:[#allocation0] sm:$0x1] %vm39, %v38
    %s41 = scalar_lea.vmem %s0, 9
    %v42 = vld [vmem:[%s41] sm:$0x1]
    %43 = vrot.lane.b32.xlu0 %v42, 72
    %v44 = vpop.permute.xlu0 %43
    %vm45 = vcmask 654912
    %46 = vst.msk [vmem:[#allocation0] sm:$0x1] %vm45, %v44
    %s47 = scalar_lea.vmem %s0, 8
    %v48 = vld [vmem:[%s47] sm:$0x1]
    %49 = vrot.lane.b32.xlu0 %v48, 64
    %v50 = vpop.permute.xlu0 %49
    %vm51 = vcmask 589312
    %52 = vst.msk [vmem:[#allocation0] sm:$0x1] %vm51, %v50
    %s53 = scalar_lea.vmem %s0, 7
    %v54 = vld [vmem:[%s53] sm:$0x1]
    %55 = vrot.lane.b32.xlu0 %v54, 56
    %v56 = vpop.permute.xlu0 %55
    %vm57 = vcmask 523712
    %58 = vst.msk [vmem:[#allocation0] sm:$0x1] %vm57, %v56
    %s59 = scalar_lea.vmem %s0, 6
    %v60 = vld [vmem:[%s59] sm:$0x1]
    %61 = vrot.lane.b32.xlu0 %v60, 48
    %v62 = vpop.permute.xlu0 %61
    %vm63 = vcmask 458112
    %64 = vst.msk [vmem:[#allocation0] sm:$0x1] %vm63, %v62
    %s65 = scalar_lea.vmem %s0, 5
    %v66 = vld [vmem:[%s65] sm:$0x1]
    %67 = vrot.lane.b32.xlu0 %v66, 40
    %v68 = vpop.permute.xlu0 %67
    %vm69 = vcmask 392512
    %70 = vst.msk [vmem:[#allocation0] sm:$0x1] %vm69, %v68
    %s71 = scalar_lea.vmem %s0, 4
    %v72 = vld [vmem:[%s71] sm:$0x1]
    %73 = vrot.lane.b32.xlu0 %v72, 32
    %v74 = vpop.permute.xlu0 %73
    %vm75 = vcmask 326912
    %76 = vst.msk [vmem:[#allocation0] sm:$0x1] %vm75, %v74
    %s77 = scalar_lea.vmem %s0, 3
    %v78 = vld [vmem:[%s77] sm:$0x1]
    %79 = vrot.lane.b32.xlu0 %v78, 24
    %v80 = vpop.permute.xlu0 %79
    %vm81 = vcmask 261312
    %82 = vst.msk [vmem:[#allocation0] sm:$0x1] %vm81, %v80
    %s83 = scalar_lea.vmem %s0, 2
    %v84 = vld [vmem:[%s83] sm:$0x1]
    %85 = vrot.lane.b32.xlu0 %v84, 16
    %v86 = vpop.permute.xlu0 %85
    %vm87 = vcmask 195712
    %88 = vst.msk [vmem:[#allocation0] sm:$0x1] %vm87, %v86
    %s89 = scalar_lea.vmem %s0, 1
    %v90 = vld [vmem:[%s89] sm:$0x1]
    %91 = vrot.lane.b32.xlu0 %v90, 8
    %v92 = vpop.permute.xlu0 %91
    %vm93 = vcmask 130112
    %94 = vst.msk [vmem:[#allocation0] sm:$0x1] %vm93, %v92
    %s96 = sshllo.u32 0, 1
    %v98 = vld [vmem:[#allocation0] sm:%s96]
    %s99 = sshllo.u32 0, 1
    %100 = vst [vmem:[%s1] sm:%s99] %v98

// kernel: bridge_forward.1
$region0: #{bridge_forward.1}
  #allocation0 [shape = 'u32[]', space=smem, size = 0x4, offset = 0x4, fixed_abs, tag = 'smem constant byte address 0x4 - core index']
  #allocation1 [shape = 'u32[144,128]{1,0:T(1,128)}', space=vmem, size = 0x12000, scoped, tag = 'internal scratch']
  #allocation2 [shape = 'f32[2,18,64]{2,1,0:T(8,128)}', space=vmem, size = 0x6000, scoped, tag = 'scratch operand']
  #allocation3 [shape = 'f32[2,18,128]{2,1,0:T(8,128)}', space=vmem, size = 0x6000, scoped, tag = 'scratch operand']
  %s0 = inlined_call_operand.vmem [shape: f32[2,16,64], index: 0, kind: input, shape index: {}]
  %s1 = inlined_call_operand.vmem [shape: f32[3,64,128], index: 1, kind: input, shape index: {}]
  %s2 = inlined_call_operand.vmem [shape: f32[3,128,128], index: 2, kind: input, shape index: {}]
  %s3 = inlined_call_operand.vmem [shape: f32[128,128], index: 3, kind: input, shape index: {}, may-alias: {3,4}]
  %s4 = inlined_call_operand.vmem [shape: f32[128,128], index: 4, kind: input, shape index: {}, may-alias: {3,4}]
  %s5 = inlined_call_operand.vmem [shape: f32[1,128], index: 5, kind: input, shape index: {}]
  %s6 = inlined_call_operand.vmem [shape: f32[1,128], index: 6, kind: input, shape index: {}]
  %s7 = inlined_call_operand.vmem [shape: f32[1,128], index: 7, kind: input, shape index: {}]
  %s8 = inlined_call_operand.vmem [shape: f32[1,128], index: 8, kind: input, shape index: {}]
  %s9 = inlined_call_operand.vmem [shape: f32[32,128], index: 9, kind: output, shape index: {}]
  %s10 = sld [smem:[#allocation0]]
  $region46: #{bridge_forward.1} parent=0
    _
  %s12 = ssub.s32 1, %s10
  %s13 = scalar_select 0, %s12, %s10
  // Predicated region
  $region2: #{bridge_forward.1} parent=0 // pred_check
    _
  $region3: #{bridge_forward.1} parent=0 // pred_check_branch
    %15 = sbr.rel (0) target = $region5
  $region4: #{bridge_forward.1} parent=0 // pred_region
    _
  $region5: #{bridge_forward.1} parent=0 // pred_fallthru
    _
  // Predicated region
  $region6: #{bridge_forward.1} parent=0 // pred_check
    _
  $region7: #{bridge_forward.1} parent=0 // pred_check_branch
    %17 = sbr.rel (0) target = $region9
  $region8: #{bridge_forward.1} parent=0 // pred_region
    _
  $region9: #{bridge_forward.1} parent=0 // pred_fallthru
    _
  // Predicated region
  $region10: #{bridge_forward.1} parent=0 // pred_check
    _
  $region11: #{bridge_forward.1} parent=0 // pred_check_branch
    %19 = sbr.rel (0) target = $region13
  $region12: #{bridge_forward.1} parent=0 // pred_region
    _
  $region13: #{bridge_forward.1} parent=0 // pred_fallthru
    _
  // Predicated region
  $region14: #{bridge_forward.1} parent=0 // pred_check
    _
  $region15: #{bridge_forward.1} parent=0 // pred_check_branch
    %21 = sbr.rel (0) target = $region17
  $region16: #{bridge_forward.1} parent=0 // pred_region
    _
  $region17: #{bridge_forward.1} parent=0 // pred_fallthru
    _
  // Predicated region
  $region18: #{bridge_forward.1} parent=0 // pred_check
    _
  $region19: #{bridge_forward.1} parent=0 // pred_check_branch
    %23 = sbr.rel (0) target = $region21
  $region20: #{bridge_forward.1} parent=0 // pred_region
    _
  $region21: #{bridge_forward.1} parent=0 // pred_fallthru
    _
  // Predicated region
  $region22: #{bridge_forward.1} parent=0 // pred_check
    _
  $region23: #{bridge_forward.1} parent=0 // pred_check_branch
    %25 = sbr.rel (0) target = $region25
  $region24: #{bridge_forward.1} parent=0 // pred_region
    _
  $region25: #{bridge_forward.1} parent=0 // pred_fallthru
    _
  // Predicated region
  $region26: #{bridge_forward.1} parent=0 // pred_check
    _
  $region27: #{bridge_forward.1} parent=0 // pred_check_branch
    %27 = sbr.rel (0) target = $region29
  $region28: #{bridge_forward.1} parent=0 // pred_region
    _
  $region29: #{bridge_forward.1} parent=0 // pred_fallthru
    _
  // Predicated region
  $region30: #{bridge_forward.1} parent=0 // pred_check
    _
  $region31: #{bridge_forward.1} parent=0 // pred_check_branch
    %29 = sbr.rel (0) target = $region33
  $region32: #{bridge_forward.1} parent=0 // pred_region
    _
  $region33: #{bridge_forward.1} parent=0 // pred_fallthru
    _
  // Predicated region
  $region34: #{bridge_forward.1} parent=0 // pred_check
    _
  $region35: #{bridge_forward.1} parent=0 // pred_check_branch
    %31 = sbr.rel (0) target = $region37
  $region36: #{bridge_forward.1} parent=0 // pred_region
    _
  $region37: #{bridge_forward.1} parent=0 // pred_fallthru
    _
  %vm32 = vcmask 523264
  %33 = vst.msk [vmem:[#allocation2] sm:$0xff] %vm32, 0.0
  %34 = vst.msk [vmem:[#allocation2 + $0x8] sm:$0xff] %vm32, 0.0
  %vm35 = vcmask 517120
  %36 = vst.msk [vmem:[#allocation2 + $0x10] sm:$0x3] %vm35, 0.0
  %37 = vst.msk [vmem:[#allocation2 + $0x18] sm:$0xff] %vm32, 0.0
  %38 = vst.msk [vmem:[#allocation2 + $0x20] sm:$0xff] %vm32, 0.0
  %39 = vst.msk [vmem:[#allocation2 + $0x28] sm:$0x3] %vm35, 0.0
  %v40 = vld [vmem:[%s0] sm:$0xff]
  %v41 = vld [vmem:[%s0 + $0x8] sm:$0xff]
  %v42 = vld [vmem:[%s0 + $0x10] sm:$0xff]
  %v43 = vld [vmem:[%s0 + $0x18] sm:$0xff]
  %44 = vst.msk [vmem:[#allocation2 + $0x1] sm:$0xff] %vm32, %v40
  %45 = vst.msk [vmem:[#allocation2 + $0x9] sm:$0xff] %vm32, %v41
  %46 = vst.msk [vmem:[#allocation2 + $0x19] sm:$0xff] %vm32, %v42
  %47 = vst.msk [vmem:[#allocation2 + $0x21] sm:$0xff] %vm32, %v43
  %v48 = vld [vmem:[#allocation2] sm:$0xff]
  %v49 = vld [vmem:[#allocation2 + $0x8] sm:$0xff]
  %v50 = vld [vmem:[#allocation2 + $0x18] sm:$0xff]
  %v51 = vld [vmem:[#allocation2 + $0x20] sm:$0xff]
  %v52 = vld [vmem:[%s1] sm:$0xff]
  %v53 = vld [vmem:[%s1 + $0x8] sm:$0xff]
  %v54 = vld [vmem:[%s1 + $0x10] sm:$0xff]
  %v55 = vld [vmem:[%s1 + $0x18] sm:$0xff]
  %v56 = vld [vmem:[%s1 + $0x20] sm:$0xff]
  %v57 = vld [vmem:[%s1 + $0x28] sm:$0xff]
  %v58 = vld [vmem:[%s1 + $0x30] sm:$0xff]
  %v59 = vld [vmem:[%s1 + $0x38] sm:$0xff]
  %v60 = vld [vmem:[#allocation2 + $0x1] sm:$0xff]
  %v61 = vld [vmem:[#allocation2 + $0x9] sm:$0xff]
  %v62 = vld [vmem:[#allocation2 + $0x19] sm:$0xff]
  %v63 = vld [vmem:[#allocation2 + $0x21] sm:$0xff]
  %s64 = scalar_lea.vmem %s1, 64
  %v65 = vld [vmem:[%s64] sm:$0xff]
  %v66 = vld [vmem:[%s64 + $0x8] sm:$0xff]
  %v67 = vld [vmem:[%s64 + $0x10] sm:$0xff]
  %v68 = vld [vmem:[%s64 + $0x18] sm:$0xff]
  %v69 = vld [vmem:[%s64 + $0x20] sm:$0xff]
  %v70 = vld [vmem:[%s64 + $0x28] sm:$0xff]
  %v71 = vld [vmem:[%s64 + $0x30] sm:$0xff]
  %v72 = vld [vmem:[%s64 + $0x38] sm:$0xff]
  %v74 = vsel %vm32, %v60, 0
  %v77 = vsel %vm32, %v61, 0
  %v80 = vsel %vm32, %v62, 0
  %v83 = vsel %vm32, %v63, 0
  %85 = vmatprep.subr.mxu0 0.0
  %86 = vmatpush1.msra.mxu0 %v65
  %87 = vmatprep.subr.mxu0 0.0
  %88 = vmatpush1.msra.mxu0 %v66
  %89 = vmatprep.subr.mxu0 0.0
  %90 = vmatpush1.msra.mxu0 %v67
  %91 = vmatprep.subr.mxu0 0.0
  %92 = vmatpush1.msra.mxu0 %v68
  %93 = vmatprep.subr.mxu0 0.0
  %94 = vmatpush1.msra.mxu0 %v69
  %95 = vmatprep.subr.mxu0 0.0
  %96 = vmatpush1.msra.mxu0 %v70
  %97 = vmatprep.subr.mxu0 0.0
  %98 = vmatpush1.msra.mxu0 %v71
  %99 = vmatprep.subr.mxu0 0.0
  %100 = vmatpush1.msra.mxu0 %v72
  %101 = vmatprep.subr.mxu0 0.0
  %102 = vmatpush1.msra.mxu0 0.0
  %103 = vmatprep.subr.mxu0 0.0
  %104 = vmatpush1.msra.mxu0 0.0
  %105 = vmatprep.subr.mxu0 0.0
  %106 = vmatpush1.msra.mxu0 0.0
  %107 = vmatprep.subr.mxu0 0.0
  %108 = vmatpush1.msra.mxu0 0.0
  %109 = vmatprep.subr.mxu0 0.0
  %110 = vmatpush1.msra.mxu0 0.0
  %111 = vmatprep.subr.mxu0 0.0
  %112 = vmatpush1.msra.mxu0 0.0
  %113 = vmatprep.subr.mxu0 0.0
  %114 = vmatpush1.msra.mxu0 0.0
  %115 = vmatprep.subr.mxu0 0.0
  %116 = vmatpush1.msra.mxu0 0.0
  %117 = vmatprep.subr.mxu0 0.0
  %118 = vmatpush1.msra.mxu0 0.0
  %119 = vmatprep.subr.mxu0 0.0
  %120 = vmatpush1.msra.mxu0 0.0
  %121 = vmatprep.subr.mxu0 0.0
  %122 = vmatpush1.msra.mxu0 0.0
  %123 = vmatprep.subr.mxu0 0.0
  %124 = vmatpush1.msra.mxu0 0.0
  %125 = vmatprep.subr.mxu0 0.0
  %126 = vmatpush1.msra.mxu0 0.0
  %127 = vmatprep.subr.mxu0 0.0
  %128 = vmatpush1.msra.mxu0 0.0
  %129 = vmatprep.subr.mxu0 0.0
  %130 = vmatpush1.msra.mxu0 0.0
  %131 = vmatprep.subr.mxu0 0.0
  %132 = vmatpush1.msra.mxu0 0.0
  %133 = vmatprep.subr.mxu0 0.0
  %134 = vmatpush1.msra.mxu0 0.0
  %135 = vmatprep.subr.mxu0 0.0
  %136 = vmatpush1.msra.mxu0 0.0
  %137 = vmatprep.subr.mxu0 0.0
  %138 = vmatpush1.msra.mxu0 0.0
  %139 = vmatprep.subr.mxu0 0.0
  %140 = vmatpush1.msra.mxu0 0.0
  %141 = vmatprep.subr.mxu0 0.0
  %142 = vmatpush1.msra.mxu0 0.0
  %143 = vmatprep.subr.mxu0 0.0
  %144 = vmatpush1.msra.mxu0 0.0
  %145 = vmatprep.subr.mxu0 0.0
  %146 = vmatpush1.msra.mxu0 0.0
  %147 = vmatprep.subr.mxu0 0.0
  %148 = vmatpush1.msra.mxu0 0.0
  %149 = vmatprep.mubr.f32.mxu0 0.0
  %150 = vmatmul.mubr.f32.gmra.mrb[0].mxu0 %v74
  %v151 = vpop.f32.mrb[0].mxu0
  %v152 = vadd.f32 0.0, %v151
  %v153 = vpop.f32.mrb[0].mxu0
  %154 = vmatprep.mubr.f32.mxu0 0.0
  %155 = vmatmul.mubr.f32.gmra.mrb[0].mxu0 %v77
  %v156 = vpop.f32.mrb[0].mxu0
  %v157 = vadd.f32 0.0, %v156
  %v158 = vpop.f32.mrb[0].mxu0
  %159 = vmatprep.mubr.f32.mxu0 0.0
  %160 = vmatmul.mubr.f32.gmra.mrb[0].mxu0 %v80
  %v161 = vpop.f32.mrb[0].mxu0
  %v162 = vadd.f32 0.0, %v161
  %v163 = vpop.f32.mrb[0].mxu0
  %164 = vmatprep.mubr.f32.mxu0 0.0
  %165 = vmatmul.mubr.f32.gmra.mrb[0].mxu0 %v83
  %v166 = vpop.f32.mrb[0].mxu0
  %v167 = vadd.f32 0.0, %v166
  %v168 = vpop.f32.mrb[0].mxu0
  %169 = vdwg.mxu0
  %v171 = vsel %vm32, %v48, 0
  %v174 = vsel %vm32, %v49, 0
  %v177 = vsel %vm32, %v50, 0
  %v180 = vsel %vm32, %v51, 0
  %182 = vmatprep.subr.mxu0 0.0
  %183 = vmatpush1.msra.mxu0 %v52
  %184 = vmatprep.subr.mxu0 0.0
  %185 = vmatpush1.msra.mxu0 %v53
  %186 = vmatprep.subr.mxu0 0.0
  %187 = vmatpush1.msra.mxu0 %v54
  %188 = vmatprep.subr.mxu0 0.0
  %189 = vmatpush1.msra.mxu0 %v55
  %190 = vmatprep.subr.mxu0 0.0
  %191 = vmatpush1.msra.mxu0 %v56
  %192 = vmatprep.subr.mxu0 0.0
  %193 = vmatpush1.msra.mxu0 %v57
  %194 = vmatprep.subr.mxu0 0.0
  %195 = vmatpush1.msra.mxu0 %v58
  %196 = vmatprep.subr.mxu0 0.0
  %197 = vmatpush1.msra.mxu0 %v59
  %198 = vmatprep.subr.mxu0 0.0
  %199 = vmatpush1.msra.mxu0 0.0
  %200 = vmatprep.subr.mxu0 0.0
  %201 = vmatpush1.msra.mxu0 0.0
  %202 = vmatprep.subr.mxu0 0.0
  %203 = vmatpush1.msra.mxu0 0.0
  %204 = vmatprep.subr.mxu0 0.0
  %205 = vmatpush1.msra.mxu0 0.0
  %206 = vmatprep.subr.mxu0 0.0
  %207 = vmatpush1.msra.mxu0 0.0
  %208 = vmatprep.subr.mxu0 0.0
  %209 = vmatpush1.msra.mxu0 0.0
  %210 = vmatprep.subr.mxu0 0.0
  %211 = vmatpush1.msra.mxu0 0.0
  %212 = vmatprep.subr.mxu0 0.0
  %213 = vmatpush1.msra.mxu0 0.0
  %214 = vmatprep.subr.mxu0 0.0
  %215 = vmatpush1.msra.mxu0 0.0
  %216 = vmatprep.subr.mxu0 0.0
  %217 = vmatpush1.msra.mxu0 0.0
  %218 = vmatprep.subr.mxu0 0.0
  %219 = vmatpush1.msra.mxu0 0.0
  %220 = vmatprep.subr.mxu0 0.0
  %221 = vmatpush1.msra.mxu0 0.0
  %222 = vmatprep.subr.mxu0 0.0
  %223 = vmatpush1.msra.mxu0 0.0
  %224 = vmatprep.subr.mxu0 0.0
  %225 = vmatpush1.msra.mxu0 0.0
  %226 = vmatprep.subr.mxu0 0.0
  %227 = vmatpush1.msra.mxu0 0.0
  %228 = vmatprep.subr.mxu0 0.0
  %229 = vmatpush1.msra.mxu0 0.0
  %230 = vmatprep.subr.mxu0 0.0
  %231 = vmatpush1.msra.mxu0 0.0
  %232 = vmatprep.subr.mxu0 0.0
  %233 = vmatpush1.msra.mxu0 0.0
  %234 = vmatprep.subr.mxu0 0.0
  %235 = vmatpush1.msra.mxu0 0.0
  %236 = vmatprep.subr.mxu0 0.0
  %237 = vmatpush1.msra.mxu0 0.0
  %238 = vmatprep.subr.mxu0 0.0
  %239 = vmatpush1.msra.mxu0 0.0
  %240 = vmatprep.subr.mxu0 0.0
  %241 = vmatpush1.msra.mxu0 0.0
  %242 = vmatprep.subr.mxu0 0.0
  %243 = vmatpush1.msra.mxu0 0.0
  %244 = vmatprep.subr.mxu0 0.0
  %245 = vmatpush1.msra.mxu0 0.0
  %246 = vmatprep.mubr.f32.mxu0 0.0
  %247 = vmatmul.mubr.f32.gmra.mrb[0].mxu0 %v171
  %v248 = vpop.f32.mrb[0].mxu0
  %v249 = vadd.f32 %v152, %v248
  %v250 = vpop.f32.mrb[0].mxu0
  %251 = vmatprep.mubr.f32.mxu0 0.0
  %252 = vmatmul.mubr.f32.gmra.mrb[0].mxu0 %v174
  %v253 = vpop.f32.mrb[0].mxu0
  %v254 = vadd.f32 %v157, %v253
  %v255 = vpop.f32.mrb[0].mxu0
  %256 = vmatprep.mubr.f32.mxu0 0.0
  %257 = vmatmul.mubr.f32.gmra.mrb[0].mxu0 %v177
  %v258 = vpop.f32.mrb[0].mxu0
  %v259 = vadd.f32 %v162, %v258
  %v260 = vpop.f32.mrb[0].mxu0
  %261 = vmatprep.mubr.f32.mxu0 0.0
  %262 = vmatmul.mubr.f32.gmra.mrb[0].mxu0 %v180
  %v263 = vpop.f32.mrb[0].mxu0
  %v264 = vadd.f32 %v167, %v263
  %v265 = vpop.f32.mrb[0].mxu0
  %266 = vdwg.mxu0
  %v267 = vld [vmem:[#allocation2 + $0x2] sm:$0xff]
  %v268 = vld [vmem:[#allocation2 + $0xa] sm:$0xff]
  %v269 = vld [vmem:[#allocation2 + $0x1a] sm:$0xff]
  %v270 = vld [vmem:[#allocation2 + $0x22] sm:$0xff]
  %s271 = scalar_lea.vmem %s1, 128
  %v272 = vld [vmem:[%s271] sm:$0xff]
  %v273 = vld [vmem:[%s271 + $0x8] sm:$0xff]
  %v274 = vld [vmem:[%s271 + $0x10] sm:$0xff]
  %v275 = vld [vmem:[%s271 + $0x18] sm:$0xff]
  %v276 = vld [vmem:[%s271 + $0x20] sm:$0xff]
  %v277 = vld [vmem:[%s271 + $0x28] sm:$0xff]
  %v278 = vld [vmem:[%s271 + $0x30] sm:$0xff]
  %v279 = vld [vmem:[%s271 + $0x38] sm:$0xff]
  %v281 = vsel %vm32, %v267, 0
  %v284 = vsel %vm32, %v268, 0
  %v287 = vsel %vm32, %v269, 0
  %v290 = vsel %vm32, %v270, 0
  %292 = vmatprep.subr.mxu0 0.0
  %293 = vmatpush1.msra.mxu0 %v272
  %294 = vmatprep.subr.mxu0 0.0
  %295 = vmatpush1.msra.mxu0 %v273
  %296 = vmatprep.subr.mxu0 0.0
  %297 = vmatpush1.msra.mxu0 %v274
  %298 = vmatprep.subr.mxu0 0.0
  %299 = vmatpush1.msra.mxu0 %v275
  %300 = vmatprep.subr.mxu0 0.0
  %301 = vmatpush1.msra.mxu0 %v276
  %302 = vmatprep.subr.mxu0 0.0
  %303 = vmatpush1.msra.mxu0 %v277
  %304 = vmatprep.subr.mxu0 0.0
  %305 = vmatpush1.msra.mxu0 %v278
  %306 = vmatprep.subr.mxu0 0.0
  %307 = vmatpush1.msra.mxu0 %v279
  %308 = vmatprep.subr.mxu0 0.0
  %309 = vmatpush1.msra.mxu0 0.0
  %310 = vmatprep.subr.mxu0 0.0
  %311 = vmatpush1.msra.mxu0 0.0
  %312 = vmatprep.subr.mxu0 0.0
  %313 = vmatpush1.msra.mxu0 0.0
  %314 = vmatprep.subr.mxu0 0.0
  %315 = vmatpush1.msra.mxu0 0.0
  %316 = vmatprep.subr.mxu0 0.0
  %317 = vmatpush1.msra.mxu0 0.0
  %318 = vmatprep.subr.mxu0 0.0
  %319 = vmatpush1.msra.mxu0 0.0
  %320 = vmatprep.subr.mxu0 0.0
  %321 = vmatpush1.msra.mxu0 0.0
  %322 = vmatprep.subr.mxu0 0.0
  %323 = vmatpush1.msra.mxu0 0.0
  %324 = vmatprep.subr.mxu0 0.0
  %325 = vmatpush1.msra.mxu0 0.0
  %326 = vmatprep.subr.mxu0 0.0
  %327 = vmatpush1.msra.mxu0 0.0
  %328 = vmatprep.subr.mxu0 0.0
  %329 = vmatpush1.msra.mxu0 0.0
  %330 = vmatprep.subr.mxu0 0.0
  %331 = vmatpush1.msra.mxu0 0.0
  %332 = vmatprep.subr.mxu0 0.0
  %333 = vmatpush1.msra.mxu0 0.0
  %334 = vmatprep.subr.mxu0 0.0
  %335 = vmatpush1.msra.mxu0 0.0
  %336 = vmatprep.subr.mxu0 0.0
  %337 = vmatpush1.msra.mxu0 0.0
  %338 = vmatprep.subr.mxu0 0.0
  %339 = vmatpush1.msra.mxu0 0.0
  %340 = vmatprep.subr.mxu0 0.0
  %341 = vmatpush1.msra.mxu0 0.0
  %342 = vmatprep.subr.mxu0 0.0
  %343 = vmatpush1.msra.mxu0 0.0
  %344 = vmatprep.subr.mxu0 0.0
  %345 = vmatpush1.msra.mxu0 0.0
  %346 = vmatprep.subr.mxu0 0.0
  %347 = vmatpush1.msra.mxu0 0.0
  %348 = vmatprep.subr.mxu0 0.0
  %349 = vmatpush1.msra.mxu0 0.0
  %350 = vmatprep.subr.mxu0 0.0
  %351 = vmatpush1.msra.mxu0 0.0
  %352 = vmatprep.subr.mxu0 0.0
  %353 = vmatpush1.msra.mxu0 0.0
  %354 = vmatprep.subr.mxu0 0.0
  %355 = vmatpush1.msra.mxu0 0.0
  %356 = vmatprep.mubr.f32.mxu0 0.0
  %357 = vmatmul.mubr.f32.gmra.mrb[0].mxu0 %v281
  %v358 = vpop.f32.mrb[0].mxu0
  %v359 = vadd.f32 0.0, %v358
  %v360 = vpop.f32.mrb[0].mxu0
  %361 = vmatprep.mubr.f32.mxu0 0.0
  %362 = vmatmul.mubr.f32.gmra.mrb[0].mxu0 %v284
  %v363 = vpop.f32.mrb[0].mxu0
  %v364 = vadd.f32 0.0, %v363
  %v365 = vpop.f32.mrb[0].mxu0
  %366 = vmatprep.mubr.f32.mxu0 0.0
  %367 = vmatmul.mubr.f32.gmra.mrb[0].mxu0 %v287
  %v368 = vpop.f32.mrb[0].mxu0
  %v369 = vadd.f32 0.0, %v368
  %v370 = vpop.f32.mrb[0].mxu0
  %371 = vmatprep.mubr.f32.mxu0 0.0
  %372 = vmatmul.mubr.f32.gmra.mrb[0].mxu0 %v290
  %v373 = vpop.f32.mrb[0].mxu0
  %v374 = vadd.f32 0.0, %v373
  %v375 = vpop.f32.mrb[0].mxu0
  %376 = vdwg.mxu0
  %v377 = vadd.f32 %v249, %v359
  %v378 = vadd.f32 %v254, %v364
  %v379 = vadd.f32 %v259, %v369
  %v380 = vadd.f32 %v264, %v374
  %v381 = vld [vmem:[%s3] sm:$0xff]
  %v382 = vld [vmem:[%s3 + $0x8] sm:$0xff]
  %v383 = vld [vmem:[%s3 + $0x10] sm:$0xff]
  %v384 = vld [vmem:[%s3 + $0x18] sm:$0xff]
  %v385 = vld [vmem:[%s3 + $0x20] sm:$0xff]
  %v386 = vld [vmem:[%s3 + $0x28] sm:$0xff]
  %v387 = vld [vmem:[%s3 + $0x30] sm:$0xff]
  %v388 = vld [vmem:[%s3 + $0x38] sm:$0xff]
  %v389 = vld [vmem:[%s3 + $0x40] sm:$0xff]
  %v390 = vld [vmem:[%s3 + $0x48] sm:$0xff]
  %v391 = vld [vmem:[%s3 + $0x50] sm:$0xff]
  %v392 = vld [vmem:[%s3 + $0x58] sm:$0xff]
  %v393 = vld [vmem:[%s3 + $0x60] sm:$0xff]
  %v394 = vld [vmem:[%s3 + $0x68] sm:$0xff]
  %v395 = vld [vmem:[%s3 + $0x70] sm:$0xff]
  %v396 = vld [vmem:[%s3 + $0x78] sm:$0xff]
  %v397 = vld [vmem:[%s5] sm:$0x1]
  %v398 = vld [vmem:[%s6] sm:$0x1]
  %v399 = vadd.f32 %v377, %v378
  %v400 = vadd.f32 %v399, %v379
  %v401 = vadd.f32 %v400, %v380
  %v402 = vrot.slane %v401, 4
  %v403 = vadd.f32 %v401, %v402
  %v404 = vrot.slane %v403, 2
  %v405 = vadd.f32 %v403, %v404
  %v406 = vrot.slane %v405, 1
  %v407 = vadd.f32 %v405, %v406
  %v408 = vmul.f32 %v377, %v377
  %v409 = vmul.f32 %v378, %v378
  %v410 = vmul.f32 %v379, %v379
  %v411 = vmul.f32 %v380, %v380
  %v412 = vadd.f32 %v408, %v409
  %v413 = vadd.f32 %v412, %v410
  %v414 = vadd.f32 %v413, %v411
  %v415 = vrot.slane %v414, 4
  %v416 = vadd.f32 %v414, %v415
  %v417 = vrot.slane %v416, 2
  %v418 = vadd.f32 %v416, %v417
  %v419 = vrot.slane %v418, 1
  %v420 = vadd.f32 %v418, %v419
  %421 = vmatprep.subr.mxu0 0.0
  %422 = vmatpush1.msra.mxu0 %v381
  %423 = vmatprep.subr.mxu0 0.0
  %424 = vmatpush1.msra.mxu0 %v382
  %425 = vmatprep.subr.mxu0 0.0
  %426 = vmatpush1.msra.mxu0 %v383
  %427 = vmatprep.subr.mxu0 0.0
  %428 = vmatpush1.msra.mxu0 %v384
  %429 = vmatprep.subr.mxu0 0.0
  %430 = vmatpush1.msra.mxu0 %v385
  %431 = vmatprep.subr.mxu0 0.0
  %432 = vmatpush1.msra.mxu0 %v386
  %433 = vmatprep.subr.mxu0 0.0
  %434 = vmatpush1.msra.mxu0 %v387
  %435 = vmatprep.subr.mxu0 0.0
  %436 = vmatpush1.msra.mxu0 %v388
  %437 = vmatprep.subr.mxu0 0.0
  %438 = vmatpush1.msra.mxu0 %v389
  %439 = vmatprep.subr.mxu0 0.0
  %440 = vmatpush1.msra.mxu0 %v390
  %441 = vmatprep.subr.mxu0 0.0
  %442 = vmatpush1.msra.mxu0 %v391
  %443 = vmatprep.subr.mxu0 0.0
  %444 = vmatpush1.msra.mxu0 %v392
  %445 = vmatprep.subr.mxu0 0.0
  %446 = vmatpush1.msra.mxu0 %v393
  %447 = vmatprep.subr.mxu0 0.0
  %448 = vmatpush1.msra.mxu0 %v394
  %449 = vmatprep.subr.mxu0 0.0
  %450 = vmatpush1.msra.mxu0 %v395
  %451 = vmatprep.subr.mxu0 0.0
  %452 = vmatpush1.msra.mxu0 %v396
  %453 = vmatprep.subr.mxu0 0.0
  %454 = vmatpush1.msra.mxu0 0.0
  %455 = vmatprep.subr.mxu0 0.0
  %456 = vmatpush1.msra.mxu0 0.0
  %457 = vmatprep.subr.mxu0 0.0
  %458 = vmatpush1.msra.mxu0 0.0
  %459 = vmatprep.subr.mxu0 0.0
  %460 = vmatpush1.msra.mxu0 0.0
  %461 = vmatprep.subr.mxu0 0.0
  %462 = vmatpush1.msra.mxu0 0.0
  %463 = vmatprep.subr.mxu0 0.0
  %464 = vmatpush1.msra.mxu0 0.0
  %465 = vmatprep.subr.mxu0 0.0
  %466 = vmatpush1.msra.mxu0 0.0
  %467 = vmatprep.subr.mxu0 0.0
  %468 = vmatpush1.msra.mxu0 0.0
  %469 = vmatprep.subr.mxu0 0.0
  %470 = vmatpush1.msra.mxu0 0.0
  %471 = vmatprep.subr.mxu0 0.0
  %472 = vmatpush1.msra.mxu0 0.0
  %473 = vmatprep.subr.mxu0 0.0
  %474 = vmatpush1.msra.mxu0 0.0
  %475 = vmatprep.subr.mxu0 0.0
  %476 = vmatpush1.msra.mxu0 0.0
  %477 = vmatprep.subr.mxu0 0.0
  %478 = vmatpush1.msra.mxu0 0.0
  %479 = vmatprep.subr.mxu0 0.0
  %480 = vmatpush1.msra.mxu0 0.0
  %481 = vmatprep.subr.mxu0 0.0
  %482 = vmatpush1.msra.mxu0 0.0
  %483 = vmatprep.subr.mxu0 0.0
  %484 = vmatpush1.msra.mxu0 0.0
  %485 = vmatprep.mubr.f32.mxu0 0.0
  %486 = vmatmul.mubr.f32.gmra.mrb[0].mxu0 %v407
  %v487 = vpop.f32.mrb[0].mxu0
  %v488 = vadd.f32 0.0, %v487
  %v489 = vpop.f32.mrb[0].mxu0
  %490 = vdwg.mxu0
  %491 = vmatprep.subr.mxu0 0.0
  %492 = vmatpush1.msra.mxu0 %v381
  %493 = vmatprep.subr.mxu0 0.0
  %494 = vmatpush1.msra.mxu0 %v382
  %495 = vmatprep.subr.mxu0 0.0
  %496 = vmatpush1.msra.mxu0 %v383
  %497 = vmatprep.subr.mxu0 0.0
  %498 = vmatpush1.msra.mxu0 %v384
  %499 = vmatprep.subr.mxu0 0.0
  %500 = vmatpush1.msra.mxu0 %v385
  %501 = vmatprep.subr.mxu0 0.0
  %502 = vmatpush1.msra.mxu0 %v386
  %503 = vmatprep.subr.mxu0 0.0
  %504 = vmatpush1.msra.mxu0 %v387
  %505 = vmatprep.subr.mxu0 0.0
  %506 = vmatpush1.msra.mxu0 %v388
  %507 = vmatprep.subr.mxu0 0.0
  %508 = vmatpush1.msra.mxu0 %v389
  %509 = vmatprep.subr.mxu0 0.0
  %510 = vmatpush1.msra.mxu0 %v390
  %511 = vmatprep.subr.mxu0 0.0
  %512 = vmatpush1.msra.mxu0 %v391
  %513 = vmatprep.subr.mxu0 0.0
  %514 = vmatpush1.msra.mxu0 %v392
  %515 = vmatprep.subr.mxu0 0.0
  %516 = vmatpush1.msra.mxu0 %v393
  %517 = vmatprep.subr.mxu0 0.0
  %518 = vmatpush1.msra.mxu0 %v394
  %519 = vmatprep.subr.mxu0 0.0
  %520 = vmatpush1.msra.mxu0 %v395
  %521 = vmatprep.subr.mxu0 0.0
  %522 = vmatpush1.msra.mxu0 %v396
  %523 = vmatprep.subr.mxu0 0.0
  %524 = vmatpush1.msra.mxu0 0.0
  %525 = vmatprep.subr.mxu0 0.0
  %526 = vmatpush1.msra.mxu0 0.0
  %527 = vmatprep.subr.mxu0 0.0
  %528 = vmatpush1.msra.mxu0 0.0
  %529 = vmatprep.subr.mxu0 0.0
  %530 = vmatpush1.msra.mxu0 0.0
  %531 = vmatprep.subr.mxu0 0.0
  %532 = vmatpush1.msra.mxu0 0.0
  %533 = vmatprep.subr.mxu0 0.0
  %534 = vmatpush1.msra.mxu0 0.0
  %535 = vmatprep.subr.mxu0 0.0
  %536 = vmatpush1.msra.mxu0 0.0
  %537 = vmatprep.subr.mxu0 0.0
  %538 = vmatpush1.msra.mxu0 0.0
  %539 = vmatprep.subr.mxu0 0.0
  %540 = vmatpush1.msra.mxu0 0.0
  %541 = vmatprep.subr.mxu0 0.0
  %542 = vmatpush1.msra.mxu0 0.0
  %543 = vmatprep.subr.mxu0 0.0
  %544 = vmatpush1.msra.mxu0 0.0
  %545 = vmatprep.subr.mxu0 0.0
  %546 = vmatpush1.msra.mxu0 0.0
  %547 = vmatprep.subr.mxu0 0.0
  %548 = vmatpush1.msra.mxu0 0.0
  %549 = vmatprep.subr.mxu0 0.0
  %550 = vmatpush1.msra.mxu0 0.0
  %551 = vmatprep.subr.mxu0 0.0
  %552 = vmatpush1.msra.mxu0 0.0
  %553 = vmatprep.subr.mxu0 0.0
  %554 = vmatpush1.msra.mxu0 0.0
  %555 = vmatprep.mubr.f32.mxu0 0.0
  %556 = vmatmul.mubr.f32.gmra.mrb[0].mxu0 %v420
  %v557 = vpop.f32.mrb[0].mxu0
  %v558 = vadd.f32 0.0, %v557
  %v559 = vpop.f32.mrb[0].mxu0
  %560 = vdwg.mxu0
  %v561 = vrcp.pop 512.0
  %v562 = vmul.f32 %v488, %v561
  %v563 = vmul.f32 %v558, %v561
  %v564 = vmul.f32 %v562, %v562
  %v565 = vsub.f32 %v563, %v564
  %v566 = vadd.f32 %v565, 1e-05
  %v567 = vrsqrt.pop %v566
  %v568 = vmul.f32 %v397, %v567
  %v569 = vmul.f32 %v562, %v568
  %v570 = vsub.f32 %v398, %v569
  %v572 = vlaneseq
  %v573 = vshrl.u32 %v572, 7
  %v574 = vsub.s32 0, %v573
  %v575 = vrot.slane %v568, %v574
  %v577 = vmul.f32 %v377, %v575
  %v578 = vmul.f32 %v378, %v575
  %v579 = vmul.f32 %v379, %v575
  %v580 = vmul.f32 %v380, %v575
  %v582 = vlaneseq
  %v583 = vshrl.u32 %v582, 7
  %v584 = vsub.s32 0, %v583
  %v585 = vrot.slane %v570, %v584
  %v587 = vadd.f32 %v577, %v585
  %v588 = vadd.f32 %v578, %v585
  %v589 = vadd.f32 %v579, %v585
  %v590 = vadd.f32 %v580, %v585
  %v591 = vmax.f32 %v587, 0.0
  %v592 = vmax.f32 %v588, 0.0
  %v593 = vmax.f32 %v589, 0.0
  %v594 = vmax.f32 %v590, 0.0
  %595 = vst [vmem:[#allocation3] sm:$0xff] 0.0
  %596 = vst [vmem:[#allocation3 + $0x8] sm:$0xff] 0.0
  %597 = vst [vmem:[#allocation3 + $0x10] sm:$0x3] 0.0
  %598 = vst [vmem:[#allocation3 + $0x18] sm:$0xff] 0.0
  %599 = vst [vmem:[#allocation3 + $0x20] sm:$0xff] 0.0
  %600 = vst [vmem:[#allocation3 + $0x28] sm:$0x3] 0.0
  %601 = vst [vmem:[#allocation3 + $0x1] sm:$0xff] %v591
  %602 = vst [vmem:[#allocation3 + $0x9] sm:$0xff] %v592
  %603 = vst [vmem:[#allocation3 + $0x19] sm:$0xff] %v593
  %604 = vst [vmem:[#allocation3 + $0x21] sm:$0xff] %v594
  %v605 = vld [vmem:[#allocation3] sm:$0xff]
  %v606 = vld [vmem:[#allocation3 + $0x8] sm:$0xff]
  %v607 = vld [vmem:[#allocation3 + $0x18] sm:$0xff]
  %v608 = vld [vmem:[#allocation3 + $0x20] sm:$0xff]
  %v609 = vld [vmem:[%s2] sm:$0xff]
  %v610 = vld [vmem:[%s2 + $0x8] sm:$0xff]
  %v611 = vld [vmem:[%s2 + $0x10] sm:$0xff]
  %v612 = vld [vmem:[%s2 + $0x18] sm:$0xff]
  %v613 = vld [vmem:[%s2 + $0x20] sm:$0xff]
  %v614 = vld [vmem:[%s2 + $0x28] sm:$0xff]
  %v615 = vld [vmem:[%s2 + $0x30] sm:$0xff]
  %v616 = vld [vmem:[%s2 + $0x38] sm:$0xff]
  %v617 = vld [vmem:[%s2 + $0x40] sm:$0xff]
  %v618 = vld [vmem:[%s2 + $0x48] sm:$0xff]
  %v619 = vld [vmem:[%s2 + $0x50] sm:$0xff]
  %v620 = vld [vmem:[%s2 + $0x58] sm:$0xff]
  %v621 = vld [vmem:[%s2 + $0x60] sm:$0xff]
  %v622 = vld [vmem:[%s2 + $0x68] sm:$0xff]
  %v623 = vld [vmem:[%s2 + $0x70] sm:$0xff]
  %v624 = vld [vmem:[%s2 + $0x78] sm:$0xff]
  %v625 = vld [vmem:[#allocation3 + $0x1] sm:$0xff]
  %v626 = vld [vmem:[#allocation3 + $0x9] sm:$0xff]
  %v627 = vld [vmem:[#allocation3 + $0x19] sm:$0xff]
  %v628 = vld [vmem:[#allocation3 + $0x21] sm:$0xff]
  %s629 = scalar_lea.vmem %s2, 128
  %v630 = vld [vmem:[%s629] sm:$0xff]
  %v631 = vld [vmem:[%s629 + $0x8] sm:$0xff]
  %v632 = vld [vmem:[%s629 + $0x10] sm:$0xff]
  %v633 = vld [vmem:[%s629 + $0x18] sm:$0xff]
  %v634 = vld [vmem:[%s629 + $0x20] sm:$0xff]
  %v635 = vld [vmem:[%s629 + $0x28] sm:$0xff]
  %v636 = vld [vmem:[%s629 + $0x30] sm:$0xff]
  %v637 = vld [vmem:[%s629 + $0x38] sm:$0xff]
  %v638 = vld [vmem:[%s629 + $0x40] sm:$0xff]
  %v639 = vld [vmem:[%s629 + $0x48] sm:$0xff]
  %v640 = vld [vmem:[%s629 + $0x50] sm:$0xff]
  %v641 = vld [vmem:[%s629 + $0x58] sm:$0xff]
  %v642 = vld [vmem:[%s629 + $0x60] sm:$0xff]
  %v643 = vld [vmem:[%s629 + $0x68] sm:$0xff]
  %v644 = vld [vmem:[%s629 + $0x70] sm:$0xff]
  %v645 = vld [vmem:[%s629 + $0x78] sm:$0xff]
  %646 = vmatprep.subr.mxu0 0.0
  %647 = vmatpush1.msra.mxu0 %v630
  %648 = vmatprep.subr.mxu0 0.0
  %649 = vmatpush1.msra.mxu0 %v631
  %650 = vmatprep.subr.mxu0 0.0
  %651 = vmatpush1.msra.mxu0 %v632
  %652 = vmatprep.subr.mxu0 0.0
  %653 = vmatpush1.msra.mxu0 %v633
  %654 = vmatprep.subr.mxu0 0.0
  %655 = vmatpush1.msra.mxu0 %v634
  %656 = vmatprep.subr.mxu0 0.0
  %657 = vmatpush1.msra.mxu0 %v635
  %658 = vmatprep.subr.mxu0 0.0
  %659 = vmatpush1.msra.mxu0 %v636
  %660 = vmatprep.subr.mxu0 0.0
  %661 = vmatpush1.msra.mxu0 %v637
  %662 = vmatprep.subr.mxu0 0.0
  %663 = vmatpush1.msra.mxu0 %v638
  %664 = vmatprep.subr.mxu0 0.0
  %665 = vmatpush1.msra.mxu0 %v639
  %666 = vmatprep.subr.mxu0 0.0
  %667 = vmatpush1.msra.mxu0 %v640
  %668 = vmatprep.subr.mxu0 0.0
  %669 = vmatpush1.msra.mxu0 %v641
  %670 = vmatprep.subr.mxu0 0.0
  %671 = vmatpush1.msra.mxu0 %v642
  %672 = vmatprep.subr.mxu0 0.0
  %673 = vmatpush1.msra.mxu0 %v643
  %674 = vmatprep.subr.mxu0 0.0
  %675 = vmatpush1.msra.mxu0 %v644
  %676 = vmatprep.subr.mxu0 0.0
  %677 = vmatpush1.msra.mxu0 %v645
  %678 = vmatprep.subr.mxu0 0.0
  %679 = vmatpush1.msra.mxu0 0.0
  %680 = vmatprep.subr.mxu0 0.0
  %681 = vmatpush1.msra.mxu0 0.0
  %682 = vmatprep.subr.mxu0 0.0
  %683 = vmatpush1.msra.mxu0 0.0
  %684 = vmatprep.subr.mxu0 0.0
  %685 = vmatpush1.msra.mxu0 0.0
  %686 = vmatprep.subr.mxu0 0.0
  %687 = vmatpush1.msra.mxu0 0.0
  %688 = vmatprep.subr.mxu0 0.0
  %689 = vmatpush1.msra.mxu0 0.0
  %690 = vmatprep.subr.mxu0 0.0
  %691 = vmatpush1.msra.mxu0 0.0
  %692 = vmatprep.subr.mxu0 0.0
  %693 = vmatpush1.msra.mxu0 0.0
  %694 = vmatprep.subr.mxu0 0.0
  %695 = vmatpush1.msra.mxu0 0.0
  %696 = vmatprep.subr.mxu0 0.0
  %697 = vmatpush1.msra.mxu0 0.0
  %698 = vmatprep.subr.mxu0 0.0
  %699 = vmatpush1.msra.mxu0 0.0
  %700 = vmatprep.subr.mxu0 0.0
  %701 = vmatpush1.msra.mxu0 0.0
  %702 = vmatprep.subr.mxu0 0.0
  %703 = vmatpush1.msra.mxu0 0.0
  %704 = vmatprep.subr.mxu0 0.0
  %705 = vmatpush1.msra.mxu0 0.0
  %706 = vmatprep.subr.mxu0 0.0
  %707 = vmatpush1.msra.mxu0 0.0
  %708 = vmatprep.subr.mxu0 0.0
  %709 = vmatpush1.msra.mxu0 0.0
  %710 = vmatprep.mubr.f32.mxu0 0.0
  %711 = vmatmul.mubr.f32.gmra.mrb[0].mxu0 %v625
  %v712 = vpop.f32.mrb[0].mxu0
  %v713 = vadd.f32 0.0, %v712
  %v714 = vpop.f32.mrb[0].mxu0
  %715 = vmatprep.mubr.f32.mxu0 0.0
  %716 = vmatmul.mubr.f32.gmra.mrb[0].mxu0 %v626
  %v717 = vpop.f32.mrb[0].mxu0
  %v718 = vadd.f32 0.0, %v717
  %v719 = vpop.f32.mrb[0].mxu0
  %720 = vmatprep.mubr.f32.mxu0 0.0
  %721 = vmatmul.mubr.f32.gmra.mrb[0].mxu0 %v627
  %v722 = vpop.f32.mrb[0].mxu0
  %v723 = vadd.f32 0.0, %v722
  %v724 = vpop.f32.mrb[0].mxu0
  %725 = vmatprep.mubr.f32.mxu0 0.0
  %726 = vmatmul.mubr.f32.gmra.mrb[0].mxu0 %v628
  %v727 = vpop.f32.mrb[0].mxu0
  %v728 = vadd.f32 0.0, %v727
  %v729 = vpop.f32.mrb[0].mxu0
  %730 = vdwg.mxu0
  %731 = vmatprep.subr.mxu0 0.0
  %732 = vmatpush1.msra.mxu0 %v609
  %733 = vmatprep.subr.mxu0 0.0
  %734 = vmatpush1.msra.mxu0 %v610
  %735 = vmatprep.subr.mxu0 0.0
  %736 = vmatpush1.msra.mxu0 %v611
  %737 = vmatprep.subr.mxu0 0.0
  %738 = vmatpush1.msra.mxu0 %v612
  %739 = vmatprep.subr.mxu0 0.0
  %740 = vmatpush1.msra.mxu0 %v613
  %741 = vmatprep.subr.mxu0 0.0
  %742 = vmatpush1.msra.mxu0 %v614
  %743 = vmatprep.subr.mxu0 0.0
  %744 = vmatpush1.msra.mxu0 %v615
  %745 = vmatprep.subr.mxu0 0.0
  %746 = vmatpush1.msra.mxu0 %v616
  %747 = vmatprep.subr.mxu0 0.0
  %748 = vmatpush1.msra.mxu0 %v617
  %749 = vmatprep.subr.mxu0 0.0
  %750 = vmatpush1.msra.mxu0 %v618
  %751 = vmatprep.subr.mxu0 0.0
  %752 = vmatpush1.msra.mxu0 %v619
  %753 = vmatprep.subr.mxu0 0.0
  %754 = vmatpush1.msra.mxu0 %v620
  %755 = vmatprep.subr.mxu0 0.0
  %756 = vmatpush1.msra.mxu0 %v621
  %757 = vmatprep.subr.mxu0 0.0
  %758 = vmatpush1.msra.mxu0 %v622
  %759 = vmatprep.subr.mxu0 0.0
  %760 = vmatpush1.msra.mxu0 %v623
  %761 = vmatprep.subr.mxu0 0.0
  %762 = vmatpush1.msra.mxu0 %v624
  %763 = vmatprep.subr.mxu0 0.0
  %764 = vmatpush1.msra.mxu0 0.0
  %765 = vmatprep.subr.mxu0 0.0
  %766 = vmatpush1.msra.mxu0 0.0
  %767 = vmatprep.subr.mxu0 0.0
  %768 = vmatpush1.msra.mxu0 0.0
  %769 = vmatprep.subr.mxu0 0.0
  %770 = vmatpush1.msra.mxu0 0.0
  %771 = vmatprep.subr.mxu0 0.0
  %772 = vmatpush1.msra.mxu0 0.0
  %773 = vmatprep.subr.mxu0 0.0
  %774 = vmatpush1.msra.mxu0 0.0
  %775 = vmatprep.subr.mxu0 0.0
  %776 = vmatpush1.msra.mxu0 0.0
  %777 = vmatprep.subr.mxu0 0.0
  %778 = vmatpush1.msra.mxu0 0.0
  %779 = vmatprep.subr.mxu0 0.0
  %780 = vmatpush1.msra.mxu0 0.0
  %781 = vmatprep.subr.mxu0 0.0
  %782 = vmatpush1.msra.mxu0 0.0
  %783 = vmatprep.subr.mxu0 0.0
  %784 = vmatpush1.msra.mxu0 0.0
  %785 = vmatprep.subr.mxu0 0.0
  %786 = vmatpush1.msra.mxu0 0.0
  %787 = vmatprep.subr.mxu0 0.0
  %788 = vmatpush1.msra.mxu0 0.0
  %789 = vmatprep.subr.mxu0 0.0
  %790 = vmatpush1.msra.mxu0 0.0
  %791 = vmatprep.subr.mxu0 0.0
  %792 = vmatpush1.msra.mxu0 0.0
  %793 = vmatprep.subr.mxu0 0.0
  %794 = vmatpush1.msra.mxu0 0.0
  %795 = vmatprep.mubr.f32.mxu0 0.0
  %796 = vmatmul.mubr.f32.gmra.mrb[0].mxu0 %v605
  %v797 = vpop.f32.mrb[0].mxu0
  %v798 = vadd.f32 %v713, %v797
  %v799 = vpop.f32.mrb[0].mxu0
  %800 = vmatprep.mubr.f32.mxu0 0.0
  %801 = vmatmul.mubr.f32.gmra.mrb[0].mxu0 %v606
  %v802 = vpop.f32.mrb[0].mxu0
  %v803 = vadd.f32 %v718, %v802
  %v804 = vpop.f32.mrb[0].mxu0
  %805 = vmatprep.mubr.f32.mxu0 0.0
  %806 = vmatmul.mubr.f32.gmra.mrb[0].mxu0 %v607
  %v807 = vpop.f32.mrb[0].mxu0
  %v808 = vadd.f32 %v723, %v807
  %v809 = vpop.f32.mrb[0].mxu0
  %810 = vmatprep.mubr.f32.mxu0 0.0
  %811 = vmatmul.mubr.f32.gmra.mrb[0].mxu0 %v608
  %v812 = vpop.f32.mrb[0].mxu0
  %v813 = vadd.f32 %v728, %v812
  %v814 = vpop.f32.mrb[0].mxu0
  %815 = vdwg.mxu0
  %v816 = vld [vmem:[#allocation3 + $0x2] sm:$0xff]
  %v817 = vld [vmem:[#allocation3 + $0xa] sm:$0xff]
  %v818 = vld [vmem:[#allocation3 + $0x1a] sm:$0xff]
  %v819 = vld [vmem:[#allocation3 + $0x22] sm:$0xff]
  %s820 = scalar_lea.vmem %s2, 256
  %v821 = vld [vmem:[%s820] sm:$0xff]
  %v822 = vld [vmem:[%s820 + $0x8] sm:$0xff]
  %v823 = vld [vmem:[%s820 + $0x10] sm:$0xff]
  %v824 = vld [vmem:[%s820 + $0x18] sm:$0xff]
  %v825 = vld [vmem:[%s820 + $0x20] sm:$0xff]
  %v826 = vld [vmem:[%s820 + $0x28] sm:$0xff]
  %v827 = vld [vmem:[%s820 + $0x30] sm:$0xff]
  %v828 = vld [vmem:[%s820 + $0x38] sm:$0xff]
  %v829 = vld [vmem:[%s820 + $0x40] sm:$0xff]
  %v830 = vld [vmem:[%s820 + $0x48] sm:$0xff]
  %v831 = vld [vmem:[%s820 + $0x50] sm:$0xff]
  %v832 = vld [vmem:[%s820 + $0x58] sm:$0xff]
  %v833 = vld [vmem:[%s820 + $0x60] sm:$0xff]
  %v834 = vld [vmem:[%s820 + $0x68] sm:$0xff]
  %v835 = vld [vmem:[%s820 + $0x70] sm:$0xff]
  %v836 = vld [vmem:[%s820 + $0x78] sm:$0xff]
  %837 = vmatprep.subr.mxu0 0.0
  %838 = vmatpush1.msra.mxu0 %v821
  %839 = vmatprep.subr.mxu0 0.0
  %840 = vmatpush1.msra.mxu0 %v822
  %841 = vmatprep.subr.mxu0 0.0
  %842 = vmatpush1.msra.mxu0 %v823
  %843 = vmatprep.subr.mxu0 0.0
  %844 = vmatpush1.msra.mxu0 %v824
  %845 = vmatprep.subr.mxu0 0.0
  %846 = vmatpush1.msra.mxu0 %v825
  %847 = vmatprep.subr.mxu0 0.0
  %848 = vmatpush1.msra.mxu0 %v826
  %849 = vmatprep.subr.mxu0 0.0
  %850 = vmatpush1.msra.mxu0 %v827
  %851 = vmatprep.subr.mxu0 0.0
  %852 = vmatpush1.msra.mxu0 %v828
  %853 = vmatprep.subr.mxu0 0.0
  %854 = vmatpush1.msra.mxu0 %v829
  %855 = vmatprep.subr.mxu0 0.0
  %856 = vmatpush1.msra.mxu0 %v830
  %857 = vmatprep.subr.mxu0 0.0
  %858 = vmatpush1.msra.mxu0 %v831
  %859 = vmatprep.subr.mxu0 0.0
  %860 = vmatpush1.msra.mxu0 %v832
  %861 = vmatprep.subr.mxu0 0.0
  %862 = vmatpush1.msra.mxu0 %v833
  %863 = vmatprep.subr.mxu0 0.0
  %864 = vmatpush1.msra.mxu0 %v834
  %865 = vmatprep.subr.mxu0 0.0
  %866 = vmatpush1.msra.mxu0 %v835
  %867 = vmatprep.subr.mxu0 0.0
  %868 = vmatpush1.msra.mxu0 %v836
  %869 = vmatprep.subr.mxu0 0.0
  %870 = vmatpush1.msra.mxu0 0.0
  %871 = vmatprep.subr.mxu0 0.0
  %872 = vmatpush1.msra.mxu0 0.0
  %873 = vmatprep.subr.mxu0 0.0
  %874 = vmatpush1.msra.mxu0 0.0
  %875 = vmatprep.subr.mxu0 0.0
  %876 = vmatpush1.msra.mxu0 0.0
  %877 = vmatprep.subr.mxu0 0.0
  %878 = vmatpush1.msra.mxu0 0.0
  %879 = vmatprep.subr.mxu0 0.0
  %880 = vmatpush1.msra.mxu0 0.0
  %881 = vmatprep.subr.mxu0 0.0
  %882 = vmatpush1.msra.mxu0 0.0
  %883 = vmatprep.subr.mxu0 0.0
  %884 = vmatpush1.msra.mxu0 0.0
  %885 = vmatprep.subr.mxu0 0.0
  %886 = vmatpush1.msra.mxu0 0.0
  %887 = vmatprep.subr.mxu0 0.0
  %888 = vmatpush1.msra.mxu0 0.0
  %889 = vmatprep.subr.mxu0 0.0
  %890 = vmatpush1.msra.mxu0 0.0
  %891 = vmatprep.subr.mxu0 0.0
  %892 = vmatpush1.msra.mxu0 0.0
  %893 = vmatprep.subr.mxu0 0.0
  %894 = vmatpush1.msra.mxu0 0.0
  %895 = vmatprep.subr.mxu0 0.0
  %896 = vmatpush1.msra.mxu0 0.0
  %897 = vmatprep.subr.mxu0 0.0
  %898 = vmatpush1.msra.mxu0 0.0
  %899 = vmatprep.subr.mxu0 0.0
  %900 = vmatpush1.msra.mxu0 0.0
  %901 = vmatprep.mubr.f32.mxu0 0.0
  %902 = vmatmul.mubr.f32.gmra.mrb[0].mxu0 %v816
  %v903 = vpop.f32.mrb[0].mxu0
  %v904 = vadd.f32 0.0, %v903
  %v905 = vpop.f32.mrb[0].mxu0
  %906 = vmatprep.mubr.f32.mxu0 0.0
  %907 = vmatmul.mubr.f32.gmra.mrb[0].mxu0 %v817
  %v908 = vpop.f32.mrb[0].mxu0
  %v909 = vadd.f32 0.0, %v908
  %v910 = vpop.f32.mrb[0].mxu0
  %911 = vmatprep.mubr.f32.mxu0 0.0
  %912 = vmatmul.mubr.f32.gmra.mrb[0].mxu0 %v818
  %v913 = vpop.f32.mrb[0].mxu0
  %v914 = vadd.f32 0.0, %v913
  %v915 = vpop.f32.mrb[0].mxu0
  %916 = vmatprep.mubr.f32.mxu0 0.0
  %917 = vmatmul.mubr.f32.gmra.mrb[0].mxu0 %v819
  %v918 = vpop.f32.mrb[0].mxu0
  %v919 = vadd.f32 0.0, %v918
  %v920 = vpop.f32.mrb[0].mxu0
  %921 = vdwg.mxu0
  %v922 = vadd.f32 %v798, %v904
  %v923 = vadd.f32 %v803, %v909
  %v924 = vadd.f32 %v808, %v914
  %v925 = vadd.f32 %v813, %v919
  %v926 = vld [vmem:[%s4] sm:$0xff]
  %v927 = vld [vmem:[%s4 + $0x8] sm:$0xff]
  %v928 = vld [vmem:[%s4 + $0x10] sm:$0xff]
  %v929 = vld [vmem:[%s4 + $0x18] sm:$0xff]
  %v930 = vld [vmem:[%s4 + $0x20] sm:$0xff]
  %v931 = vld [vmem:[%s4 + $0x28] sm:$0xff]
  %v932 = vld [vmem:[%s4 + $0x30] sm:$0xff]
  %v933 = vld [vmem:[%s4 + $0x38] sm:$0xff]
  %v934 = vld [vmem:[%s4 + $0x40] sm:$0xff]
  %v935 = vld [vmem:[%s4 + $0x48] sm:$0xff]
  %v936 = vld [vmem:[%s4 + $0x50] sm:$0xff]
  %v937 = vld [vmem:[%s4 + $0x58] sm:$0xff]
  %v938 = vld [vmem:[%s4 + $0x60] sm:$0xff]
  %v939 = vld [vmem:[%s4 + $0x68] sm:$0xff]
  %v940 = vld [vmem:[%s4 + $0x70] sm:$0xff]
  %v941 = vld [vmem:[%s4 + $0x78] sm:$0xff]
  %v942 = vld [vmem:[%s7] sm:$0x1]
  %v943 = vld [vmem:[%s8] sm:$0x1]
  %v944 = vadd.f32 %v922, %v923
  %v945 = vadd.f32 %v944, %v924
  %v946 = vadd.f32 %v945, %v925
  %v947 = vrot.slane %v946, 4
  %v948 = vadd.f32 %v946, %v947
  %v949 = vrot.slane %v948, 2
  %v950 = vadd.f32 %v948, %v949
  %v951 = vrot.slane %v950, 1
  %v952 = vadd.f32 %v950, %v951
  %v953 = vmul.f32 %v922, %v922
  %v954 = vmul.f32 %v923, %v923
  %v955 = vmul.f32 %v924, %v924
  %v956 = vmul.f32 %v925, %v925
  %v957 = vadd.f32 %v953, %v954
  %v958 = vadd.f32 %v957, %v955
  %v959 = vadd.f32 %v958, %v956
  %v960 = vrot.slane %v959, 4
  %v961 = vadd.f32 %v959, %v960
  %v962 = vrot.slane %v961, 2
  %v963 = vadd.f32 %v961, %v962
  %v964 = vrot.slane %v963, 1
  %v965 = vadd.f32 %v963, %v964
  %966 = vmatprep.subr.mxu0 0.0
  %967 = vmatpush1.msra.mxu0 %v926
  %968 = vmatprep.subr.mxu0 0.0
  %969 = vmatpush1.msra.mxu0 %v927
  %970 = vmatprep.subr.mxu0 0.0
  %971 = vmatpush1.msra.mxu0 %v928
  %972 = vmatprep.subr.mxu0 0.0
  %973 = vmatpush1.msra.mxu0 %v929
  %974 = vmatprep.subr.mxu0 0.0
  %975 = vmatpush1.msra.mxu0 %v930
  %976 = vmatprep.subr.mxu0 0.0
  %977 = vmatpush1.msra.mxu0 %v931
  %978 = vmatprep.subr.mxu0 0.0
  %979 = vmatpush1.msra.mxu0 %v932
  %980 = vmatprep.subr.mxu0 0.0
  %981 = vmatpush1.msra.mxu0 %v933
  %982 = vmatprep.subr.mxu0 0.0
  %983 = vmatpush1.msra.mxu0 %v934
  %984 = vmatprep.subr.mxu0 0.0
  %985 = vmatpush1.msra.mxu0 %v935
  %986 = vmatprep.subr.mxu0 0.0
  %987 = vmatpush1.msra.mxu0 %v936
  %988 = vmatprep.subr.mxu0 0.0
  %989 = vmatpush1.msra.mxu0 %v937
  %990 = vmatprep.subr.mxu0 0.0
  %991 = vmatpush1.msra.mxu0 %v938
  %992 = vmatprep.subr.mxu0 0.0
  %993 = vmatpush1.msra.mxu0 %v939
  %994 = vmatprep.subr.mxu0 0.0
  %995 = vmatpush1.msra.mxu0 %v940
  %996 = vmatprep.subr.mxu0 0.0
  %997 = vmatpush1.msra.mxu0 %v941
  %998 = vmatprep.subr.mxu0 0.0
  %999 = vmatpush1.msra.mxu0 0.0
  %1000 = vmatprep.subr.mxu0 0.0
  %1001 = vmatpush1.msra.mxu0 0.0
  %1002 = vmatprep.subr.mxu0 0.0
  %1003 = vmatpush1.msra.mxu0 0.0
  %1004 = vmatprep.subr.mxu0 0.0
  %1005 = vmatpush1.msra.mxu0 0.0
  %1006 = vmatprep.subr.mxu0 0.0
  %1007 = vmatpush1.msra.mxu0 0.0
  %1008 = vmatprep.subr.mxu0 0.0
  %1009 = vmatpush1.msra.mxu0 0.0
  %1010 = vmatprep.subr.mxu0 0.0
  %1011 = vmatpush1.msra.mxu0 0.0
  %1012 = vmatprep.subr.mxu0 0.0
  %1013 = vmatpush1.msra.mxu0 0.0
  %1014 = vmatprep.subr.mxu0 0.0
  %1015 = vmatpush1.msra.mxu0 0.0
  %1016 = vmatprep.subr.mxu0 0.0
  %1017 = vmatpush1.msra.mxu0 0.0
  %1018 = vmatprep.subr.mxu0 0.0
  %1019 = vmatpush1.msra.mxu0 0.0
  %1020 = vmatprep.subr.mxu0 0.0
  %1021 = vmatpush1.msra.mxu0 0.0
  %1022 = vmatprep.subr.mxu0 0.0
  %1023 = vmatpush1.msra.mxu0 0.0
  %1024 = vmatprep.subr.mxu0 0.0
  %1025 = vmatpush1.msra.mxu0 0.0
  %1026 = vmatprep.subr.mxu0 0.0
  %1027 = vmatpush1.msra.mxu0 0.0
  %1028 = vmatprep.subr.mxu0 0.0
  %1029 = vmatpush1.msra.mxu0 0.0
  %1030 = vmatprep.mubr.f32.mxu0 0.0
  %1031 = vmatmul.mubr.f32.gmra.mrb[0].mxu0 %v952
  %v1032 = vpop.f32.mrb[0].mxu0
  %v1033 = vadd.f32 0.0, %v1032
  %v1034 = vpop.f32.mrb[0].mxu0
  %1035 = vdwg.mxu0
  %1036 = vmatprep.subr.mxu0 0.0
  %1037 = vmatpush1.msra.mxu0 %v926
  %1038 = vmatprep.subr.mxu0 0.0
  %1039 = vmatpush1.msra.mxu0 %v927
  %1040 = vmatprep.subr.mxu0 0.0
  %1041 = vmatpush1.msra.mxu0 %v928
  %1042 = vmatprep.subr.mxu0 0.0
  %1043 = vmatpush1.msra.mxu0 %v929
  %1044 = vmatprep.subr.mxu0 0.0
  %1045 = vmatpush1.msra.mxu0 %v930
  %1046 = vmatprep.subr.mxu0 0.0
  %1047 = vmatpush1.msra.mxu0 %v931
  %1048 = vmatprep.subr.mxu0 0.0
  %1049 = vmatpush1.msra.mxu0 %v932
  %1050 = vmatprep.subr.mxu0 0.0
  %1051 = vmatpush1.msra.mxu0 %v933
  %1052 = vmatprep.subr.mxu0 0.0
  %1053 = vmatpush1.msra.mxu0 %v934
  %1054 = vmatprep.subr.mxu0 0.0
  %1055 = vmatpush1.msra.mxu0 %v935
  %1056 = vmatprep.subr.mxu0 0.0
  %1057 = vmatpush1.msra.mxu0 %v936
  %1058 = vmatprep.subr.mxu0 0.0
  %1059 = vmatpush1.msra.mxu0 %v937
  %1060 = vmatprep.subr.mxu0 0.0
  %1061 = vmatpush1.msra.mxu0 %v938
  %1062 = vmatprep.subr.mxu0 0.0
  %1063 = vmatpush1.msra.mxu0 %v939
  %1064 = vmatprep.subr.mxu0 0.0
  %1065 = vmatpush1.msra.mxu0 %v940
  %1066 = vmatprep.subr.mxu0 0.0
  %1067 = vmatpush1.msra.mxu0 %v941
  %1068 = vmatprep.subr.mxu0 0.0
  %1069 = vmatpush1.msra.mxu0 0.0
  %1070 = vmatprep.subr.mxu0 0.0
  %1071 = vmatpush1.msra.mxu0 0.0
  %1072 = vmatprep.subr.mxu0 0.0
  %1073 = vmatpush1.msra.mxu0 0.0
  %1074 = vmatprep.subr.mxu0 0.0
  %1075 = vmatpush1.msra.mxu0 0.0
  %1076 = vmatprep.subr.mxu0 0.0
  %1077 = vmatpush1.msra.mxu0 0.0
  %1078 = vmatprep.subr.mxu0 0.0
  %1079 = vmatpush1.msra.mxu0 0.0
  %1080 = vmatprep.subr.mxu0 0.0
  %1081 = vmatpush1.msra.mxu0 0.0
  %1082 = vmatprep.subr.mxu0 0.0
  %1083 = vmatpush1.msra.mxu0 0.0
  %1084 = vmatprep.subr.mxu0 0.0
  %1085 = vmatpush1.msra.mxu0 0.0
  %1086 = vmatprep.subr.mxu0 0.0
  %1087 = vmatpush1.msra.mxu0 0.0
  %1088 = vmatprep.subr.mxu0 0.0
  %1089 = vmatpush1.msra.mxu0 0.0
  %1090 = vmatprep.subr.mxu0 0.0
  %1091 = vmatpush1.msra.mxu0 0.0
  %1092 = vmatprep.subr.mxu0 0.0
  %1093 = vmatpush1.msra.mxu0 0.0
  %1094 = vmatprep.subr.mxu0 0.0
  %1095 = vmatpush1.msra.mxu0 0.0
  %1096 = vmatprep.subr.mxu0 0.0
  %1097 = vmatpush1.msra.mxu0 0.0
  %1098 = vmatprep.subr.mxu0 0.0
  %1099 = vmatpush1.msra.mxu0 0.0
  %1100 = vmatprep.mubr.f32.mxu0 0.0
  %1101 = vmatmul.mubr.f32.gmra.mrb[0].mxu0 %v965
  %v1102 = vpop.f32.mrb[0].mxu0
  %v1103 = vadd.f32 0.0, %v1102
  %v1104 = vpop.f32.mrb[0].mxu0
  %1105 = vdwg.mxu0
  %v1106 = vmul.f32 %v1033, %v561
  %v1107 = vmul.f32 %v1103, %v561
  %v1108 = vmul.f32 %v1106, %v1106
  %v1109 = vsub.f32 %v1107, %v1108
  %v1110 = vadd.f32 %v1109, 1e-05
  %v1111 = vrsqrt.pop %v1110
  %v1112 = vmul.f32 %v942, %v1111
  %v1113 = vmul.f32 %v1106, %v1112
  %v1114 = vsub.f32 %v943, %v1113
  %v1116 = vlaneseq
  %v1117 = vshrl.u32 %v1116, 7
  %v1118 = vsub.s32 0, %v1117
  %v1119 = vrot.slane %v1112, %v1118
  %v1121 = vmul.f32 %v922, %v1119
  %v1122 = vmul.f32 %v923, %v1119
  %v1123 = vmul.f32 %v924, %v1119
  %v1124 = vmul.f32 %v925, %v1119
  %v1126 = vlaneseq
  %v1127 = vshrl.u32 %v1126, 7
  %v1128 = vsub.s32 0, %v1127
  %v1129 = vrot.slane %v1114, %v1128
  %v1131 = vadd.f32 %v1121, %v1129
  %v1132 = vadd.f32 %v1122, %v1129
  %v1133 = vadd.f32 %v1123, %v1129
  %v1134 = vadd.f32 %v1124, %v1129
  %v1135 = vmax.f32 %v1131, 0.0
  %v1136 = vmax.f32 %v1132, 0.0
  %v1137 = vmax.f32 %v1133, 0.0
  %v1138 = vmax.f32 %v1134, 0.0
  %1139 = vst [vmem:[%s9] sm:$0xff] %v1135
  %1140 = vst [vmem:[%s9 + $0x8] sm:$0xff] %v1136
  %1141 = vst [vmem:[%s9 + $0x10] sm:$0xff] %v1137
  %1142 = vst [vmem:[%s9 + $0x18] sm:$0xff] %v1138
  // Predicated region
  $region38: #{bridge_forward.1} parent=0 // pred_check
    _
  $region39: #{bridge_forward.1} parent=0 // pred_check_branch
    %1144 = sbr.rel (0) target = $region41
  $region40: #{bridge_forward.1} parent=0 // pred_region
    _
  $region41: #{bridge_forward.1} parent=0 // pred_fallthru
    _
  // Predicated region
  $region42: #{bridge_forward.1} parent=0 // pred_check
    _
  $region43: #{bridge_forward.1} parent=0 // pred_check_branch
    %1146 = sbr.rel (0) target = $region45
  $region44: #{bridge_forward.1} parent=0 // pred_region
    _
  $region45: #{bridge_forward.1} parent=0 // pred_fallthru
    _

</llo_original>
